<compile_context>
chip_gen: v7x
topology: tpu7x:2x2x1
jax: 0.10.0
libtpu: 0.0.40
codegen_flags: <defaults>
</compile_context>

<pallas_src>
import jax
import jax.numpy as jnp
from jax.experimental import pallas as pl
from jax.experimental.pallas import tpu as pltpu


# -----------------------------------------------------------------------------
# Fused WavenetBlock kernel (all layers; one grid step per batch chunk)
# -----------------------------------------------------------------------------
def _make_block_kernel(T, Nblk, Bblk, num_layers, K, C_res, C_dil, C_skip,
                       pad_max, compute_dtype):

    def kernel(t_ref,        # (1, Nblk) int32: time index within sequence
               x_ref,        # (C_res, Nblk) input residual (batch folded in N)
               wfg_ref,      # (L, 2*C_dil, K*C_res)  [filter; gate] packed
               bfg_ref,      # (L, 2*C_dil, 1) f32
               wrs_ref,      # (L, C_res + C_skip, C_dil)  [residual; skip]
               brs_ref,      # (L, C_res + C_skip, 1) f32
               res_ref,      # (C_res, Nblk) residual out
               skip_ref,     # (L, C_skip, Nblk) skips out
               xp_ref):      # VMEM scratch (C_res, Nblk + 2*pad_max) f32
        # Zero ONLY the two pad bands (never overwritten afterwards).  Done
        # every grid step (tiny: C_res x pad_max stores each) so it remains
        # correct when the parallel grid axis is sharded across v7x's two TCs.
        if pad_max > 0:
            xp_ref[:, :pad_max] = jnp.zeros((C_res, pad_max), jnp.float32)
            xp_ref[:, pad_max + Nblk:] = jnp.zeros((C_res, pad_max), jnp.float32)

        x = x_ref[...].astype(jnp.float32)          # (C_res, Nblk) residual, f32
        t = t_ref[...]                              # (1, Nblk) int32

        # Static unroll is fine for small num_layers (<= ~4).
        for layer in range(num_layers):
            d = 2 ** layer
            half = K // 2

            # Current residual into the center of the zero-banded scratch.
            xp_ref[:, pad_max:pad_max + Nblk] = x

            # im2col: K dilated taps stacked along sublanes -> (K*C_res, Nblk).
            taps = []
            for k in range(K):
                off = (k - half) * d
                tap = xp_ref[:, pad_max + off: pad_max + off + Nblk]
                if Bblk > 1 and off != 0:
                    # Batch is folded along lanes: zero out taps that would
                    # read across a sequence boundary ('same' zero padding).
                    valid = jnp.logical_and(t + off >= 0, t + off < T)
                    tap = jnp.where(valid, tap, 0.0)
                taps.append(tap)
            xcol = jnp.concatenate(taps, axis=0).astype(compute_dtype)

            # Filter + gate convs: one MXU matmul, f32 accumulation, bias fused.
            fg = jnp.dot(wfg_ref[layer], xcol,
                         preferred_element_type=jnp.float32) + bfg_ref[layer]
            filt = jnp.tanh(fg[:C_dil])
            # sigmoid(z) = 0.5 * (tanh(z/2) + 1): rides the EUP, no divide.
            gate = 0.5 * jnp.tanh(0.5 * fg[C_dil:]) + 0.5
            gated = filt * gate                      # (C_dil, Nblk) f32

            # Residual + skip 1x1 convs: one MXU matmul, bias fused.
            rs = jnp.dot(wrs_ref[layer], gated.astype(compute_dtype),
                         preferred_element_type=jnp.float32) + brs_ref[layer]
            x = rs[:C_res] + x                       # residual stays in VMEM, f32
            skip_ref[layer] = rs[C_res:].astype(skip_ref.dtype)

        res_ref[...] = x.astype(res_ref.dtype)

    return kernel


# -----------------------------------------------------------------------------
# One-time parameter packing (hoisted out of the per-call path)
# -----------------------------------------------------------------------------
def pack_block_params(layer_params, compute_dtype=jnp.bfloat16):
    """PyTorch Conv1d weights -> packed matrices consumed by the fused kernel.

    Weights are stored in `compute_dtype` (bf16 by default: ~2x MXU rate, half
    the VMEM/vreg footprint).  Biases stay f32 and are added post-accumulation.
    """
    wfg, bfg, wrs, brs = [], [], [], []
    for p in layer_params:
        C_dil, C_res, K = p["wf"].shape
        # (C_out, C_in, K) -> (C_out, K*C_in); column block k holds tap k.
        wf_flat = jnp.transpose(p["wf"], (0, 2, 1)).reshape(C_dil, K * C_res)
        wg_flat = jnp.transpose(p["wg"], (0, 2, 1)).reshape(C_dil, K * C_res)
        wfg.append(jnp.concatenate([wf_flat, wg_flat], axis=0))
        bfg.append(jnp.concatenate([p["bf"], p["bg"]])[:, None])
        wrs.append(jnp.concatenate([p["wr"][:, :, 0], p["ws"][:, :, 0]], axis=0))
        brs.append(jnp.concatenate([p["br"], p["bs"]])[:, None])
    return (jnp.stack(wfg).astype(compute_dtype),
            jnp.stack(bfg).astype(jnp.float32),
            jnp.stack(wrs).astype(compute_dtype),
            jnp.stack(brs).astype(jnp.float32))


# -----------------------------------------------------------------------------
# Fused block forward: single pallas_call
# -----------------------------------------------------------------------------
@jax.jit
def wavenet_block_pallas(x, wfg, bfg, wrs, brs):
    """x: (B, C_res, T) float32.  Returns (residual_out, stacked_skips)."""
    B, C_res, T = x.shape
    L, two_cdil, KC = wfg.shape
    C_dil = wrs.shape[2]
    C_skip = wrs.shape[1] - C_res
    assert KC % C_res == 0
    K = KC // C_res
    assert K % 2 == 1, "non-causal 'same' padding path assumes odd kernel_size"
    assert two_cdil == 2 * C_dil
    pad_max = (K - 1) * (2 ** (L - 1)) // 2          # largest layer dilation pad
    compute_dtype = wfg.dtype                        # bf16 or f32 MXU path

    # Fold batch into the matmul N (lane) dimension: (B, C, T) -> (C, B*T).
    xf = jnp.transpose(x, (1, 0, 2)).reshape(C_res, B * T)
    # Per-sequence time index used to mask dilated taps at sequence boundaries.
    t_idx = jnp.tile(jnp.arange(T, dtype=jnp.int32), B).reshape(1, B * T)

    # Grid over batch chunks: keep >=2 parallel steps (both v7x TCs busy) as
    # long as each step still presents >=256 lanes to the MXU; else one step.
    NB = 2 if (B % 2 == 0 and (B // 2) * T >= 256) else 1
    Bblk = B // NB
    Nblk = Bblk * T

    kern = _make_block_kernel(T, Nblk, Bblk, L, K, C_res, C_dil, C_skip,
                              pad_max, compute_dtype)

    grid_spec = pltpu.PrefetchScalarGridSpec(
        num_scalar_prefetch=0,
        grid=(NB,),
        in_specs=[
            pl.BlockSpec((1, Nblk), lambda i: (0, i)),                      # t_idx
            pl.BlockSpec((C_res, Nblk), lambda i: (0, i)),                  # x
            pl.BlockSpec((L, 2 * C_dil, KC), lambda i: (0, 0, 0)),          # wfg
            pl.BlockSpec((L, 2 * C_dil, 1), lambda i: (0, 0, 0)),           # bfg
            pl.BlockSpec((L, C_res + C_skip, C_dil), lambda i: (0, 0, 0)),  # wrs
            pl.BlockSpec((L, C_res + C_skip, 1), lambda i: (0, 0, 0)),      # brs
        ],
        out_specs=[
            pl.BlockSpec((C_res, Nblk), lambda i: (0, i)),                  # residual
            pl.BlockSpec((L, C_skip, Nblk), lambda i: (0, 0, i)),           # skips
        ],
        scratch_shapes=[pltpu.VMEM((C_res, Nblk + 2 * pad_max), jnp.float32)],
    )

    res_f, skips_f = pl.pallas_call(
        kern,
        out_shape=(jax.ShapeDtypeStruct((C_res, B * T), x.dtype),
                   jax.ShapeDtypeStruct((L, C_skip, B * T), x.dtype)),
        grid_spec=grid_spec,
        compiler_params=pltpu.CompilerParams(
            dimension_semantics=("parallel",),        # batch chunks -> both TCs (v7x)
            vmem_limit_bytes=32 * 1024 * 1024,        # explicit; v5e default is 16 MiB
        ),
    )(t_idx, xf, wfg, bfg, wrs, brs)

    # Unfold back to the module's (B, C, T) layouts (cheap layout plumbing).
    res = res_f.reshape(C_res, B, T).transpose(1, 0, 2)
    skips = skips_f.reshape(L, C_skip, B, T).transpose(0, 2, 1, 3)
    return res, skips


# -----------------------------------------------------------------------------
# Pure-JAX reference (for correctness checks)
# -----------------------------------------------------------------------------
def _conv1d_ref(x, w, b, dilation, pad, compute_dtype=jnp.float32):
    y = jax.lax.conv_general_dilated(
        x.astype(compute_dtype), w.astype(compute_dtype),
        window_strides=(1,), padding=[(pad, pad)],
        rhs_dilation=(dilation,), dimension_numbers=("NCH", "OIH", "NCH"),
        preferred_element_type=jnp.float32)
    return y + b[None, :, None]


def wavenet_block_ref(x, layer_params, kernel_size=3, compute_dtype=jnp.float32):
    residual = x
    skips = []
    for i, p in enumerate(layer_params):
        d = 2 ** i
        pad = (kernel_size - 1) * d // 2
        f = jnp.tanh(_conv1d_ref(residual, p["wf"], p["bf"], d, pad, compute_dtype))
        g = jax.nn.sigmoid(_conv1d_ref(residual, p["wg"], p["bg"], d, pad, compute_dtype))
        gated = f * g
        skips.append(_conv1d_ref(gated, p["ws"], p["bs"], 1, 0, compute_dtype))
        residual = _conv1d_ref(gated, p["wr"], p["br"], 1, 0, compute_dtype) + residual
    return residual, jnp.stack(skips)


# -----------------------------------------------------------------------------
# Deterministic parameter init (shapes from WavenetLayer.__init__)
# -----------------------------------------------------------------------------
def init_params(key, num_layers=2, ch_residual=32, ch_dilation=32,
                ch_skip=64, kernel_size=3):
    params = []
    for _ in range(num_layers):
        key, *ks = jax.random.split(key, 9)
        p = {
            "wf": jax.random.normal(ks[0], (ch_dilation, ch_residual, kernel_size),
                                    jnp.float32) * 0.1,
            "bf": jax.random.normal(ks[1], (ch_dilation,), jnp.float32) * 0.1,
            "wg": jax.random.normal(ks[2], (ch_dilation, ch_residual, kernel_size),
                                    jnp.float32) * 0.1,
            "bg": jax.random.normal(ks[3], (ch_dilation,), jnp.float32) * 0.1,
            "wr": jax.random.normal(ks[4], (ch_residual, ch_dilation, 1),
                                    jnp.float32) * 0.1,
            "br": jax.random.normal(ks[5], (ch_residual,), jnp.float32) * 0.1,
            "ws": jax.random.normal(ks[6], (ch_skip, ch_dilation, 1),
                                    jnp.float32) * 0.1,
            "bs": jax.random.normal(ks[7], (ch_skip,), jnp.float32) * 0.1,
        }
        params.append(p)
    return params


if __name__ == "__main__":
    key = jax.random.PRNGKey(0)
    k_x, k_p = jax.random.split(key)

    B, C_RES, T = 2, 32, 128
    NUM_LAYERS, C_DIL, C_SKIP, K = 2, 32, 64, 3

    x = jax.random.normal(k_x, (B, C_RES, T), jnp.float32)
    params = init_params(k_p, NUM_LAYERS, C_RES, C_DIL, C_SKIP, K)

    # --- f32 MXU path: tight check against the PyTorch-semantics reference ---
    packed_f32 = pack_block_params(params, compute_dtype=jnp.float32)
    res, skips = wavenet_block_pallas(x, *packed_f32)
    res = jax.block_until_ready(res)
    skips = jax.block_until_ready(skips)
    assert res.shape == (B, C_RES, T)
    assert skips.shape == (NUM_LAYERS, B, C_SKIP, T)

    res_ref, skips_ref = wavenet_block_ref(x, params, kernel_size=K)
    assert jnp.allclose(res, res_ref, atol=1e-3, rtol=1e-3)
    assert jnp.allclose(skips, skips_ref, atol=1e-3, rtol=1e-3)

    # --- bf16 MXU path (default for perf): compare against a reference that
    #     quantizes conv inputs/weights to bf16 at the same points while
    #     accumulating in f32, so the check verifies the kernel structure
    #     rather than intrinsic bf16 rounding error.
    packed_bf16 = pack_block_params(params)            # compute_dtype=bf16 default
    res16, skips16 = wavenet_block_pallas(x, *packed_bf16)
    res16 = jax.block_until_ready(res16)
    skips16 = jax.block_until_ready(skips16)

    res_ref16, skips_ref16 = wavenet_block_ref(x, params, kernel_size=K,
                                               compute_dtype=jnp.bfloat16)
    assert jnp.allclose(res16, res_ref16, atol=1e-2, rtol=1e-2)
    assert jnp.allclose(skips16, skips_ref16, atol=1e-2, rtol=1e-2)

    print("KERNEL_OK")
</pallas_src>

<mosaic_0001>
module attributes {stable_mosaic.version = 11 : i64} {
  func.func @kernel(%arg0: i32, %arg1: memref<1x256xi32, #tpu.memory_space<vmem>>, %arg2: memref<32x256xf32, #tpu.memory_space<vmem>>, %arg3: memref<2x64x96xf32, #tpu.memory_space<vmem>>, %arg4: memref<2x64x1xf32, #tpu.memory_space<vmem>>, %arg5: memref<2x96x32xf32, #tpu.memory_space<vmem>>, %arg6: memref<2x96x1xf32, #tpu.memory_space<vmem>>, %arg7: memref<32x256xf32, #tpu.memory_space<vmem>>, %arg8: memref<2x64x256xf32, #tpu.memory_space<vmem>>, %arg9: memref<32x260xf32, #tpu.memory_space<vmem>>) attributes {dimension_semantics = [#tpu.dimension_semantics<parallel>], iteration_bounds = array<i64: 1>, scalar_prefetch = 0 : i64, scratch_operands = 1 : i64, tpu.core_type = #tpu.core_type<tc>, window_params = [{transform_indices = @transform_0, window_bounds = array<i64: 1, 256>}, {transform_indices = @transform_1, window_bounds = array<i64: 32, 256>}, {pipeline_mode = #tpu.pipeline_mode<synchronous>, transform_indices = @transform_2, window_bounds = array<i64: 2, 64, 96>}, {pipeline_mode = #tpu.pipeline_mode<synchronous>, transform_indices = @transform_3, window_bounds = array<i64: 2, 64, 1>}, {pipeline_mode = #tpu.pipeline_mode<synchronous>, transform_indices = @transform_4, window_bounds = array<i64: 2, 96, 32>}, {pipeline_mode = #tpu.pipeline_mode<synchronous>, transform_indices = @transform_5, window_bounds = array<i64: 2, 96, 1>}, {transform_indices = @transform_6, window_bounds = array<i64: 32, 256>}, {transform_indices = @transform_7, window_bounds = array<i64: 2, 64, 256>}]} {
    %cst = arith.constant 0.000000e+00 : f32
    %0 = vector.broadcast %cst : f32 to vector<32x2xf32>
    %c0 = arith.constant 0 : index
    %c0_0 = arith.constant 0 : index
    %1 = vector.load %arg9[%c0, %c0_0] : memref<32x260xf32, #tpu.memory_space<vmem>>, vector<32x2xf32>
    tpu.vector_store %arg9[%c0, %c0_0], %0 {strides = array<i32>} : memref<32x260xf32, #tpu.memory_space<vmem>>, vector<32x2xf32>,
    %cst_1 = arith.constant 0.000000e+00 : f32
    %2 = vector.broadcast %cst_1 : f32 to vector<32x2xf32>
    %c0_2 = arith.constant 0 : index
    %c258 = arith.constant 258 : index
    %3 = vector.load %arg9[%c0_2, %c258] : memref<32x260xf32, #tpu.memory_space<vmem>>, vector<32x2xf32>
    tpu.vector_store %arg9[%c0_2, %c258], %2 {strides = array<i32>} : memref<32x260xf32, #tpu.memory_space<vmem>>, vector<32x2xf32>,
    %c0_3 = arith.constant 0 : index
    %c0_4 = arith.constant 0 : index
    %4 = vector.load %arg2[%c0_3, %c0_4] : memref<32x256xf32, #tpu.memory_space<vmem>>, vector<32x256xf32>
    %c0_5 = arith.constant 0 : index
    %c0_6 = arith.constant 0 : index
    %5 = vector.load %arg1[%c0_5, %c0_6] : memref<1x256xi32, #tpu.memory_space<vmem>>, vector<1x256xi32>
    %c0_7 = arith.constant 0 : index
    %c2 = arith.constant 2 : index
    %6 = vector.load %arg9[%c0_7, %c2] : memref<32x260xf32, #tpu.memory_space<vmem>>, vector<32x256xf32>
    tpu.vector_store %arg9[%c0_7, %c2], %4 {strides = array<i32>} : memref<32x260xf32, #tpu.memory_space<vmem>>, vector<32x256xf32>,
    %c0_8 = arith.constant 0 : index
    %c1 = arith.constant 1 : index
    %7 = vector.load %arg9[%c0_8, %c1] : memref<32x260xf32, #tpu.memory_space<vmem>>, vector<32x256xf32>
    %c-1_i32 = arith.constant -1 : i32
    %8 = vector.broadcast %c-1_i32 : i32 to vector<1x256xi32>
    %9 = arith.addi %5, %8 : vector<1x256xi32>
    %c0_i32 = arith.constant 0 : i32
    %10 = vector.broadcast %c0_i32 : i32 to vector<1x256xi32>
    %11 = arith.cmpi sge, %9, %10 : vector<1x256xi32>
    %c-1_i32_9 = arith.constant -1 : i32
    %12 = vector.broadcast %c-1_i32_9 : i32 to vector<1x256xi32>
    %13 = arith.addi %5, %12 : vector<1x256xi32>
    %c128_i32 = arith.constant 128 : i32
    %14 = vector.broadcast %c128_i32 : i32 to vector<1x256xi32>
    %15 = arith.cmpi slt, %13, %14 : vector<1x256xi32>
    %16 = arith.andi %11, %15 : vector<1x256xi1>
    %cst_10 = arith.constant 0.000000e+00 : f32
    %17 = vector.shape_cast %16 : vector<1x256xi1> to vector<1x256xi1>
    %18 = vector.broadcast %17 : vector<1x256xi1> to vector<32x256xi1>
    %19 = vector.broadcast %cst_10 : f32 to vector<32x256xf32>
    %20 = arith.select %18, %7, %19 : vector<32x256xi1>, vector<32x256xf32>
    %c0_11 = arith.constant 0 : index
    %c2_12 = arith.constant 2 : index
    %21 = vector.load %arg9[%c0_11, %c2_12] : memref<32x260xf32, #tpu.memory_space<vmem>>, vector<32x256xf32>
    %c0_13 = arith.constant 0 : index
    %c3 = arith.constant 3 : index
    %22 = vector.load %arg9[%c0_13, %c3] : memref<32x260xf32, #tpu.memory_space<vmem>>, vector<32x256xf32>
    %c1_i32 = arith.constant 1 : i32
    %23 = vector.broadcast %c1_i32 : i32 to vector<1x256xi32>
    %24 = arith.addi %5, %23 : vector<1x256xi32>
    %c0_i32_14 = arith.constant 0 : i32
    %25 = vector.broadcast %c0_i32_14 : i32 to vector<1x256xi32>
    %26 = arith.cmpi sge, %24, %25 : vector<1x256xi32>
    %c1_i32_15 = arith.constant 1 : i32
    %27 = vector.broadcast %c1_i32_15 : i32 to vector<1x256xi32>
    %28 = arith.addi %5, %27 : vector<1x256xi32>
    %c128_i32_16 = arith.constant 128 : i32
    %29 = vector.broadcast %c128_i32_16 : i32 to vector<1x256xi32>
    %30 = arith.cmpi slt, %28, %29 : vector<1x256xi32>
    %31 = arith.andi %26, %30 : vector<1x256xi1>
    %cst_17 = arith.constant 0.000000e+00 : f32
    %32 = vector.shape_cast %31 : vector<1x256xi1> to vector<1x256xi1>
    %33 = vector.broadcast %32 : vector<1x256xi1> to vector<32x256xi1>
    %34 = vector.broadcast %cst_17 : f32 to vector<32x256xf32>
    %35 = arith.select %33, %22, %34 : vector<32x256xi1>, vector<32x256xf32>
    %36 = tpu.concatenate %20, %21, %35 in 0 : vector<32x256xf32>, vector<32x256xf32>, vector<32x256xf32> -> vector<96x256xf32>
    %c0_18 = arith.constant 0 : index
    %c0_19 = arith.constant 0 : index
    %c0_20 = arith.constant 0 : index
    %37 = vector.load %arg3[%c0_18, %c0_19, %c0_20] : memref<2x64x96xf32, #tpu.memory_space<vmem>>, vector<1x64x96xf32>
    %38 = vector.shape_cast %37 : vector<1x64x96xf32> to vector<64x96xf32>
    %cst_21 = arith.constant dense<0.000000e+00> : vector<64x256xf32>
    %39 = tpu.matmul %38, %36, %cst_21 {dimension_numbers = #tpu.dot_dimension_numbers<[1], [0], [0], [1], [0, 0, 1, 1], [], []>} : vector<64x96xf32>, vector<96x256xf32>, vector<64x256xf32> -> vector<64x256xf32>
    %c0_22 = arith.constant 0 : index
    %c0_23 = arith.constant 0 : index
    %c0_24 = arith.constant 0 : index
    %40 = vector.load %arg4[%c0_22, %c0_23, %c0_24] : memref<2x64x1xf32, #tpu.memory_space<vmem>>, vector<1x64x1xf32>
    %41 = vector.shape_cast %40 : vector<1x64x1xf32> to vector<64x1xf32>
    %42 = vector.broadcast %41 : vector<64x1xf32> to vector<64x256xf32>
    %43 = arith.addf %39, %42 : vector<64x256xf32>
    %44 = vector.extract_strided_slice %43 {offsets = [0, 0], sizes = [32, 256], strides = [1, 1]} : vector<64x256xf32> to vector<32x256xf32>
    %45 = math.tanh %44 : vector<32x256xf32>
    %46 = vector.extract_strided_slice %43 {offsets = [32, 0], sizes = [32, 256], strides = [1, 1]} : vector<64x256xf32> to vector<32x256xf32>
    %cst_25 = arith.constant 5.000000e-01 : f32
    %47 = vector.broadcast %cst_25 : f32 to vector<32x256xf32>
    %48 = arith.mulf %47, %46 : vector<32x256xf32>
    %49 = math.tanh %48 : vector<32x256xf32>
    %cst_26 = arith.constant 5.000000e-01 : f32
    %50 = vector.broadcast %cst_26 : f32 to vector<32x256xf32>
    %51 = arith.mulf %50, %49 : vector<32x256xf32>
    %cst_27 = arith.constant 5.000000e-01 : f32
    %52 = vector.broadcast %cst_27 : f32 to vector<32x256xf32>
    %53 = arith.addf %51, %52 : vector<32x256xf32>
    %54 = arith.mulf %45, %53 : vector<32x256xf32>
    %c0_28 = arith.constant 0 : index
    %c0_29 = arith.constant 0 : index
    %c0_30 = arith.constant 0 : index
    %55 = vector.load %arg5[%c0_28, %c0_29, %c0_30] : memref<2x96x32xf32, #tpu.memory_space<vmem>>, vector<1x96x32xf32>
    %56 = vector.shape_cast %55 : vector<1x96x32xf32> to vector<96x32xf32>
    %cst_31 = arith.constant dense<0.000000e+00> : vector<96x256xf32>
    %57 = tpu.matmul %56, %54, %cst_31 {dimension_numbers = #tpu.dot_dimension_numbers<[1], [0], [0], [1], [0, 0, 1, 1], [], []>} : vector<96x32xf32>, vector<32x256xf32>, vector<96x256xf32> -> vector<96x256xf32>
    %c0_32 = arith.constant 0 : index
    %c0_33 = arith.constant 0 : index
    %c0_34 = arith.constant 0 : index
    %58 = vector.load %arg6[%c0_32, %c0_33, %c0_34] : memref<2x96x1xf32, #tpu.memory_space<vmem>>, vector<1x96x1xf32>
    %59 = vector.shape_cast %58 : vector<1x96x1xf32> to vector<96x1xf32>
    %60 = vector.broadcast %59 : vector<96x1xf32> to vector<96x256xf32>
    %61 = arith.addf %57, %60 : vector<96x256xf32>
    %62 = vector.extract_strided_slice %61 {offsets = [0, 0], sizes = [32, 256], strides = [1, 1]} : vector<96x256xf32> to vector<32x256xf32>
    %63 = arith.addf %62, %4 : vector<32x256xf32>
    %64 = vector.extract_strided_slice %61 {offsets = [32, 0], sizes = [64, 256], strides = [1, 1]} : vector<96x256xf32> to vector<64x256xf32>
    %c0_35 = arith.constant 0 : index
    %c0_36 = arith.constant 0 : index
    %c0_37 = arith.constant 0 : index
    %65 = vector.load %arg8[%c0_35, %c0_36, %c0_37] : memref<2x64x256xf32, #tpu.memory_space<vmem>>, vector<1x64x256xf32>
    %66 = vector.shape_cast %65 : vector<1x64x256xf32> to vector<64x256xf32>
    %67 = vector.shape_cast %64 : vector<64x256xf32> to vector<1x64x256xf32>
    tpu.vector_store %arg8[%c0_35, %c0_36, %c0_37], %67 {strides = array<i32>} : memref<2x64x256xf32, #tpu.memory_space<vmem>>, vector<1x64x256xf32>,
    %c0_38 = arith.constant 0 : index
    %c2_39 = arith.constant 2 : index
    %68 = vector.load %arg9[%c0_38, %c2_39] : memref<32x260xf32, #tpu.memory_space<vmem>>, vector<32x256xf32>
    tpu.vector_store %arg9[%c0_38, %c2_39], %63 {strides = array<i32>} : memref<32x260xf32, #tpu.memory_space<vmem>>, vector<32x256xf32>,
    %c0_40 = arith.constant 0 : index
    %c0_41 = arith.constant 0 : index
    %69 = vector.load %arg9[%c0_40, %c0_41] : memref<32x260xf32, #tpu.memory_space<vmem>>, vector<32x256xf32>
    %c-2_i32 = arith.constant -2 : i32
    %70 = vector.broadcast %c-2_i32 : i32 to vector<1x256xi32>
    %71 = arith.addi %5, %70 : vector<1x256xi32>
    %c0_i32_42 = arith.constant 0 : i32
    %72 = vector.broadcast %c0_i32_42 : i32 to vector<1x256xi32>
    %73 = arith.cmpi sge, %71, %72 : vector<1x256xi32>
    %c-2_i32_43 = arith.constant -2 : i32
    %74 = vector.broadcast %c-2_i32_43 : i32 to vector<1x256xi32>
    %75 = arith.addi %5, %74 : vector<1x256xi32>
    %c128_i32_44 = arith.constant 128 : i32
    %76 = vector.broadcast %c128_i32_44 : i32 to vector<1x256xi32>
    %77 = arith.cmpi slt, %75, %76 : vector<1x256xi32>
    %78 = arith.andi %73, %77 : vector<1x256xi1>
    %cst_45 = arith.constant 0.000000e+00 : f32
    %79 = vector.shape_cast %78 : vector<1x256xi1> to vector<1x256xi1>
    %80 = vector.broadcast %79 : vector<1x256xi1> to vector<32x256xi1>
    %81 = vector.broadcast %cst_45 : f32 to vector<32x256xf32>
    %82 = arith.select %80, %69, %81 : vector<32x256xi1>, vector<32x256xf32>
    %c0_46 = arith.constant 0 : index
    %c2_47 = arith.constant 2 : index
    %83 = vector.load %arg9[%c0_46, %c2_47] : memref<32x260xf32, #tpu.memory_space<vmem>>, vector<32x256xf32>
    %c0_48 = arith.constant 0 : index
    %c4 = arith.constant 4 : index
    %84 = vector.load %arg9[%c0_48, %c4] : memref<32x260xf32, #tpu.memory_space<vmem>>, vector<32x256xf32>
    %c2_i32 = arith.constant 2 : i32
    %85 = vector.broadcast %c2_i32 : i32 to vector<1x256xi32>
    %86 = arith.addi %5, %85 : vector<1x256xi32>
    %c0_i32_49 = arith.constant 0 : i32
    %87 = vector.broadcast %c0_i32_49 : i32 to vector<1x256xi32>
    %88 = arith.cmpi sge, %86, %87 : vector<1x256xi32>
    %c2_i32_50 = arith.constant 2 : i32
    %89 = vector.broadcast %c2_i32_50 : i32 to vector<1x256xi32>
    %90 = arith.addi %5, %89 : vector<1x256xi32>
    %c128_i32_51 = arith.constant 128 : i32
    %91 = vector.broadcast %c128_i32_51 : i32 to vector<1x256xi32>
    %92 = arith.cmpi slt, %90, %91 : vector<1x256xi32>
    %93 = arith.andi %88, %92 : vector<1x256xi1>
    %cst_52 = arith.constant 0.000000e+00 : f32
    %94 = vector.shape_cast %93 : vector<1x256xi1> to vector<1x256xi1>
    %95 = vector.broadcast %94 : vector<1x256xi1> to vector<32x256xi1>
    %96 = vector.broadcast %cst_52 : f32 to vector<32x256xf32>
    %97 = arith.select %95, %84, %96 : vector<32x256xi1>, vector<32x256xf32>
    %98 = tpu.concatenate %82, %83, %97 in 0 : vector<32x256xf32>, vector<32x256xf32>, vector<32x256xf32> -> vector<96x256xf32>
    %c1_53 = arith.constant 1 : index
    %c0_54 = arith.constant 0 : index
    %c0_55 = arith.constant 0 : index
    %99 = vector.load %arg3[%c1_53, %c0_54, %c0_55] : memref<2x64x96xf32, #tpu.memory_space<vmem>>, vector<1x64x96xf32>
    %100 = vector.shape_cast %99 : vector<1x64x96xf32> to vector<64x96xf32>
    %cst_56 = arith.constant dense<0.000000e+00> : vector<64x256xf32>
    %101 = tpu.matmul %100, %98, %cst_56 {dimension_numbers = #tpu.dot_dimension_numbers<[1], [0], [0], [1], [0, 0, 1, 1], [], []>} : vector<64x96xf32>, vector<96x256xf32>, vector<64x256xf32> -> vector<64x256xf32>
    %c1_57 = arith.constant 1 : index
    %c0_58 = arith.constant 0 : index
    %c0_59 = arith.constant 0 : index
    %102 = vector.load %arg4[%c1_57, %c0_58, %c0_59] : memref<2x64x1xf32, #tpu.memory_space<vmem>>, vector<1x64x1xf32>
    %103 = vector.shape_cast %102 : vector<1x64x1xf32> to vector<64x1xf32>
    %104 = vector.broadcast %103 : vector<64x1xf32> to vector<64x256xf32>
    %105 = arith.addf %101, %104 : vector<64x256xf32>
    %106 = vector.extract_strided_slice %105 {offsets = [0, 0], sizes = [32, 256], strides = [1, 1]} : vector<64x256xf32> to vector<32x256xf32>
    %107 = math.tanh %106 : vector<32x256xf32>
    %108 = vector.extract_strided_slice %105 {offsets = [32, 0], sizes = [32, 256], strides = [1, 1]} : vector<64x256xf32> to vector<32x256xf32>
    %cst_60 = arith.constant 5.000000e-01 : f32
    %109 = vector.broadcast %cst_60 : f32 to vector<32x256xf32>
    %110 = arith.mulf %109, %108 : vector<32x256xf32>
    %111 = math.tanh %110 : vector<32x256xf32>
    %cst_61 = arith.constant 5.000000e-01 : f32
    %112 = vector.broadcast %cst_61 : f32 to vector<32x256xf32>
    %113 = arith.mulf %112, %111 : vector<32x256xf32>
    %cst_62 = arith.constant 5.000000e-01 : f32
    %114 = vector.broadcast %cst_62 : f32 to vector<32x256xf32>
    %115 = arith.addf %113, %114 : vector<32x256xf32>
    %116 = arith.mulf %107, %115 : vector<32x256xf32>
    %c1_63 = arith.constant 1 : index
    %c0_64 = arith.constant 0 : index
    %c0_65 = arith.constant 0 : index
    %117 = vector.load %arg5[%c1_63, %c0_64, %c0_65] : memref<2x96x32xf32, #tpu.memory_space<vmem>>, vector<1x96x32xf32>
    %118 = vector.shape_cast %117 : vector<1x96x32xf32> to vector<96x32xf32>
    %cst_66 = arith.constant dense<0.000000e+00> : vector<96x256xf32>
    %119 = tpu.matmul %118, %116, %cst_66 {dimension_numbers = #tpu.dot_dimension_numbers<[1], [0], [0], [1], [0, 0, 1, 1], [], []>} : vector<96x32xf32>, vector<32x256xf32>, vector<96x256xf32> -> vector<96x256xf32>
    %c1_67 = arith.constant 1 : index
    %c0_68 = arith.constant 0 : index
    %c0_69 = arith.constant 0 : index
    %120 = vector.load %arg6[%c1_67, %c0_68, %c0_69] : memref<2x96x1xf32, #tpu.memory_space<vmem>>, vector<1x96x1xf32>
    %121 = vector.shape_cast %120 : vector<1x96x1xf32> to vector<96x1xf32>
    %122 = vector.broadcast %121 : vector<96x1xf32> to vector<96x256xf32>
    %123 = arith.addf %119, %122 : vector<96x256xf32>
    %124 = vector.extract_strided_slice %123 {offsets = [0, 0], sizes = [32, 256], strides = [1, 1]} : vector<96x256xf32> to vector<32x256xf32>
    %125 = arith.addf %124, %63 : vector<32x256xf32>
    %126 = vector.extract_strided_slice %123 {offsets = [32, 0], sizes = [64, 256], strides = [1, 1]} : vector<96x256xf32> to vector<64x256xf32>
    %c1_70 = arith.constant 1 : index
    %c0_71 = arith.constant 0 : index
    %c0_72 = arith.constant 0 : index
    %127 = vector.load %arg8[%c1_70, %c0_71, %c0_72] : memref<2x64x256xf32, #tpu.memory_space<vmem>>, vector<1x64x256xf32>
    %128 = vector.shape_cast %127 : vector<1x64x256xf32> to vector<64x256xf32>
    %129 = vector.shape_cast %126 : vector<64x256xf32> to vector<1x64x256xf32>
    tpu.vector_store %arg8[%c1_70, %c0_71, %c0_72], %129 {strides = array<i32>} : memref<2x64x256xf32, #tpu.memory_space<vmem>>, vector<1x64x256xf32>,
    %c0_73 = arith.constant 0 : index
    %c0_74 = arith.constant 0 : index
    %130 = vector.load %arg7[%c0_73, %c0_74] : memref<32x256xf32, #tpu.memory_space<vmem>>, vector<32x256xf32>
    tpu.vector_store %arg7[%c0_73, %c0_74], %125 {strides = array<i32>} : memref<32x256xf32, #tpu.memory_space<vmem>>, vector<32x256xf32>,
    return
  }
  func.func @transform_0(%arg0: i32) -> (i32, i32) {
    %c0_i32 = arith.constant 0 : i32
    %c0_i32_0 = arith.constant 0 : i32
    return %c0_i32, %arg0 : i32, i32
  }
  func.func @transform_1(%arg0: i32) -> (i32, i32) {
    %c0_i32 = arith.constant 0 : i32
    %c0_i32_0 = arith.constant 0 : i32
    return %c0_i32, %arg0 : i32, i32
  }
  func.func @transform_2(%arg0: i32) -> (i32, i32, i32) {
    %c0_i32 = arith.constant 0 : i32
    %c0_i32_0 = arith.constant 0 : i32
    %c0_i32_1 = arith.constant 0 : i32
    %c0_i32_2 = arith.constant 0 : i32
    return %c0_i32, %c0_i32_0, %c0_i32_1 : i32, i32, i32
  }
  func.func @transform_3(%arg0: i32) -> (i32, i32, i32) {
    %c0_i32 = arith.constant 0 : i32
    %c0_i32_0 = arith.constant 0 : i32
    %c0_i32_1 = arith.constant 0 : i32
    %c0_i32_2 = arith.constant 0 : i32
    return %c0_i32, %c0_i32_0, %c0_i32_1 : i32, i32, i32
  }
  func.func @transform_4(%arg0: i32) -> (i32, i32, i32) {
    %c0_i32 = arith.constant 0 : i32
    %c0_i32_0 = arith.constant 0 : i32
    %c0_i32_1 = arith.constant 0 : i32
    %c0_i32_2 = arith.constant 0 : i32
    return %c0_i32, %c0_i32_0, %c0_i32_1 : i32, i32, i32
  }
  func.func @transform_5(%arg0: i32) -> (i32, i32, i32) {
    %c0_i32 = arith.constant 0 : i32
    %c0_i32_0 = arith.constant 0 : i32
    %c0_i32_1 = arith.constant 0 : i32
    %c0_i32_2 = arith.constant 0 : i32
    return %c0_i32, %c0_i32_0, %c0_i32_1 : i32, i32, i32
  }
  func.func @transform_6(%arg0: i32) -> (i32, i32) {
    %c0_i32 = arith.constant 0 : i32
    %c0_i32_0 = arith.constant 0 : i32
    return %c0_i32, %arg0 : i32, i32
  }
  func.func @transform_7(%arg0: i32) -> (i32, i32, i32) {
    %c0_i32 = arith.constant 0 : i32
    %c0_i32_0 = arith.constant 0 : i32
    %c0_i32_1 = arith.constant 0 : i32
    return %c0_i32, %c0_i32_0, %arg0 : i32, i32, i32
  }
}

</mosaic_0001>

<llo_original>
// kernel: wavenet_block_pallas.1
$region0: #{wavenet_block_pallas.1}
  #allocation0 [shape = 'u32[]', space=smem, size = 0x4, offset = 0x4, fixed_abs, tag = 'smem constant byte address 0x4 - core index']
  #allocation1 [shape = 'u32[144,128]{1,0:T(1,128)}', space=vmem, size = 0x12000, scoped, tag = 'internal scratch']
  #allocation2 [shape = 'f32[32,260]{1,0:T(8,128)}', space=vmem, size = 0xc000, scoped, tag = 'scratch operand']
  %s0 = inlined_call_operand.vmem [shape: s32[1,256], index: 0, kind: input, shape index: {}]
  %s1 = inlined_call_operand.vmem [shape: f32[32,256], index: 1, kind: input, shape index: {}]
  %s2 = inlined_call_operand.vmem [shape: f32[2,64,96], index: 2, kind: input, shape index: {}]
  %s3 = inlined_call_operand.vmem [shape: f32[2,64,1], index: 3, kind: input, shape index: {}]
  %s4 = inlined_call_operand.vmem [shape: f32[2,96,32], index: 4, kind: input, shape index: {}]
  %s5 = inlined_call_operand.vmem [shape: f32[2,96,1], index: 5, kind: input, shape index: {}]
  %s6 = inlined_call_operand.vmem [shape: f32[32,256], index: 6, kind: output, shape index: {0}]
  %s7 = inlined_call_operand.vmem [shape: f32[2,64,256], index: 7, kind: output, shape index: {1}]
  %8 = xla_tuple %s6, %s7
  %s9 = sld [smem:[#allocation0]]
  $region42: #{wavenet_block_pallas.1} parent=0
    _
  %s11 = ssub.s32 1, %s9
  %s12 = scalar_select 0, %s11, %s9
  // Predicated region
  $region2: #{wavenet_block_pallas.1} parent=0 // pred_check
    _
  $region3: #{wavenet_block_pallas.1} parent=0 // pred_check_branch
    %14 = sbr.rel (0) target = $region5
  $region4: #{wavenet_block_pallas.1} parent=0 // pred_region
    _
  $region5: #{wavenet_block_pallas.1} parent=0 // pred_fallthru
    _
  // Predicated region
  $region6: #{wavenet_block_pallas.1} parent=0 // pred_check
    _
  $region7: #{wavenet_block_pallas.1} parent=0 // pred_check_branch
    %16 = sbr.rel (0) target = $region9
  $region8: #{wavenet_block_pallas.1} parent=0 // pred_region
    _
  $region9: #{wavenet_block_pallas.1} parent=0 // pred_fallthru
    _
  // Predicated region
  $region10: #{wavenet_block_pallas.1} parent=0 // pred_check
    _
  $region11: #{wavenet_block_pallas.1} parent=0 // pred_check_branch
    %18 = sbr.rel (0) target = $region13
  $region12: #{wavenet_block_pallas.1} parent=0 // pred_region
    _
  $region13: #{wavenet_block_pallas.1} parent=0 // pred_fallthru
    _
  // Predicated region
  $region14: #{wavenet_block_pallas.1} parent=0 // pred_check
    _
  $region15: #{wavenet_block_pallas.1} parent=0 // pred_check_branch
    %20 = sbr.rel (0) target = $region17
  $region16: #{wavenet_block_pallas.1} parent=0 // pred_region
    _
  $region17: #{wavenet_block_pallas.1} parent=0 // pred_fallthru
    _
  // Predicated region
  $region18: #{wavenet_block_pallas.1} parent=0 // pred_check
    _
  $region19: #{wavenet_block_pallas.1} parent=0 // pred_check_branch
    %22 = sbr.rel (0) target = $region21
  $region20: #{wavenet_block_pallas.1} parent=0 // pred_region
    _
  $region21: #{wavenet_block_pallas.1} parent=0 // pred_fallthru
    _
  // Predicated region
  $region22: #{wavenet_block_pallas.1} parent=0 // pred_check
    _
  $region23: #{wavenet_block_pallas.1} parent=0 // pred_check_branch
    %24 = sbr.rel (0) target = $region25
  $region24: #{wavenet_block_pallas.1} parent=0 // pred_region
    _
  $region25: #{wavenet_block_pallas.1} parent=0 // pred_fallthru
    _
  %vm25 = vcmask 15360
  %26 = vst.msk [vmem:[#allocation2] sm:$0xff] %vm25, 0.0
  %27 = vst.msk [vmem:[#allocation2 + $0x18] sm:$0xff] %vm25, 0.0
  %28 = vst.msk [vmem:[#allocation2 + $0x30] sm:$0xff] %vm25, 0.0
  %29 = vst.msk [vmem:[#allocation2 + $0x48] sm:$0xff] %vm25, 0.0
  %vm30 = vcmask 31760
  %31 = vst.msk [vmem:[#allocation2 + $0x10] sm:$0xff] %vm30, 0.0
  %32 = vst.msk [vmem:[#allocation2 + $0x28] sm:$0xff] %vm30, 0.0
  %33 = vst.msk [vmem:[#allocation2 + $0x40] sm:$0xff] %vm30, 0.0
  %34 = vst.msk [vmem:[#allocation2 + $0x58] sm:$0xff] %vm30, 0.0
  %v35 = vld [vmem:[%s1] sm:$0xff]
  %v36 = vld [vmem:[%s1 + $0x8] sm:$0xff]
  %v37 = vld [vmem:[%s1 + $0x10] sm:$0xff]
  %v38 = vld [vmem:[%s1 + $0x18] sm:$0xff]
  %v39 = vld [vmem:[%s1 + $0x20] sm:$0xff]
  %v40 = vld [vmem:[%s1 + $0x28] sm:$0xff]
  %v41 = vld [vmem:[%s1 + $0x30] sm:$0xff]
  %v42 = vld [vmem:[%s1 + $0x38] sm:$0xff]
  %v43 = vld [vmem:[%s0] sm:$0x3]
  %52 = vrot.lane.b32.xlu0 %v35, 2
  %v53 = vpop.permute.xlu0 %52
  %54 = vrot.lane.b32.xlu0 %v36, 2
  %v55 = vpop.permute.xlu0 %54
  %56 = vrot.lane.b32.xlu0 %v37, 2
  %v57 = vpop.permute.xlu0 %56
  %58 = vrot.lane.b32.xlu0 %v38, 2
  %v59 = vpop.permute.xlu0 %58
  %60 = vrot.lane.b32.xlu0 %v39, 2
  %v61 = vpop.permute.xlu0 %60
  %62 = vrot.lane.b32.xlu0 %v40, 2
  %v63 = vpop.permute.xlu0 %62
  %64 = vrot.lane.b32.xlu0 %v41, 2
  %v65 = vpop.permute.xlu0 %64
  %66 = vrot.lane.b32.xlu0 %v42, 2
  %v67 = vpop.permute.xlu0 %66
  %v68 = vsel %vm25, %v53, %v55
  %v69 = vsel %vm25, %v57, %v59
  %v70 = vsel %vm25, %v61, %v63
  %v71 = vsel %vm25, %v65, %v67
  %vm84 = vcmask 1047568
  %85 = vst.msk [vmem:[#allocation2] sm:$0xff] %vm84, %v53
  %86 = vst [vmem:[#allocation2 + $0x8] sm:$0xff] %v68
  %87 = vst.msk [vmem:[#allocation2 + $0x10] sm:$0xff] %vm25, %v55
  %88 = vst.msk [vmem:[#allocation2 + $0x18] sm:$0xff] %vm84, %v57
  %89 = vst [vmem:[#allocation2 + $0x20] sm:$0xff] %v69
  %90 = vst.msk [vmem:[#allocation2 + $0x28] sm:$0xff] %vm25, %v59
  %91 = vst.msk [vmem:[#allocation2 + $0x30] sm:$0xff] %vm84, %v61
  %92 = vst [vmem:[#allocation2 + $0x38] sm:$0xff] %v70
  %93 = vst.msk [vmem:[#allocation2 + $0x40] sm:$0xff] %vm25, %v63
  %94 = vst.msk [vmem:[#allocation2 + $0x48] sm:$0xff] %vm84, %v65
  %95 = vst [vmem:[#allocation2 + $0x50] sm:$0xff] %v71
  %96 = vst.msk [vmem:[#allocation2 + $0x58] sm:$0xff] %vm25, %v67
  %v97 = vld [vmem:[#allocation2] sm:$0xff]
  %v98 = vld [vmem:[#allocation2 + $0x8] sm:$0xff]
  %v99 = vld [vmem:[#allocation2 + $0x10] sm:$0xff]
  %v100 = vld [vmem:[#allocation2 + $0x18] sm:$0xff]
  %v101 = vld [vmem:[#allocation2 + $0x20] sm:$0xff]
  %v102 = vld [vmem:[#allocation2 + $0x28] sm:$0xff]
  %v103 = vld [vmem:[#allocation2 + $0x30] sm:$0xff]
  %v104 = vld [vmem:[#allocation2 + $0x38] sm:$0xff]
  %v105 = vld [vmem:[#allocation2 + $0x40] sm:$0xff]
  %v106 = vld [vmem:[#allocation2 + $0x48] sm:$0xff]
  %v107 = vld [vmem:[#allocation2 + $0x50] sm:$0xff]
  %v108 = vld [vmem:[#allocation2 + $0x58] sm:$0xff]
  %v109 = vadd.s32 %v43, 4294967295
  %vm110 = vcmp.ge.s32.totalorder %v109, 0
  %vm111 = vcmp.lt.s32.totalorder %v109, 128
  %vm112 = vmand %vm110, %vm111
  %v113 = vsel %vm112, 1, 0
  %v114 = vlaneseq
  %v115 = vshrl.u32 %v114, 7
  %v116 = vsub.s32 0, %v115
  %v117 = vrot.slane %v113, %v116
  %v118 = vlaneseq
  %v119 = vshrl.u32 %v118, 7
  %v120 = vsub.s32 1, %v119
  %v121 = vrot.slane %v113, %v120
  %vm122 = vcmp.eq.s32.totalorder %v117, 1
  %vm123 = vcmp.eq.s32.totalorder %v121, 1
  %136 = vrot.lane.b32.xlu0 %v97, 127
  %v137 = vpop.permute.xlu0 %136
  %138 = vrot.lane.b32.xlu0 %v98, 127
  %v139 = vpop.permute.xlu0 %138
  %140 = vrot.lane.b32.xlu0 %v99, 127
  %v141 = vpop.permute.xlu0 %140
  %142 = vrot.lane.b32.xlu0 %v100, 127
  %v143 = vpop.permute.xlu0 %142
  %144 = vrot.lane.b32.xlu0 %v101, 127
  %v145 = vpop.permute.xlu0 %144
  %146 = vrot.lane.b32.xlu0 %v102, 127
  %v147 = vpop.permute.xlu0 %146
  %148 = vrot.lane.b32.xlu0 %v103, 127
  %v149 = vpop.permute.xlu0 %148
  %150 = vrot.lane.b32.xlu0 %v104, 127
  %v151 = vpop.permute.xlu0 %150
  %152 = vrot.lane.b32.xlu0 %v105, 127
  %v153 = vpop.permute.xlu0 %152
  %154 = vrot.lane.b32.xlu0 %v106, 127
  %v155 = vpop.permute.xlu0 %154
  %156 = vrot.lane.b32.xlu0 %v107, 127
  %v157 = vpop.permute.xlu0 %156
  %158 = vrot.lane.b32.xlu0 %v108, 127
  %v159 = vpop.permute.xlu0 %158
  %vm160 = vcmask 1039360
  %v161 = vsel %vm160, %v137, %v139
  %v162 = vsel %vm160, %v139, %v141
  %v163 = vsel %vm160, %v143, %v145
  %v164 = vsel %vm160, %v145, %v147
  %v165 = vsel %vm160, %v149, %v151
  %v166 = vsel %vm160, %v151, %v153
  %v167 = vsel %vm160, %v155, %v157
  %v168 = vsel %vm160, %v157, %v159
  %v177 = vsel %vm122, %v161, 0.0
  %v178 = vsel %vm123, %v162, 0.0
  %v179 = vsel %vm122, %v163, 0.0
  %v180 = vsel %vm123, %v164, 0.0
  %v181 = vsel %vm122, %v165, 0.0
  %v182 = vsel %vm123, %v166, 0.0
  %v183 = vsel %vm122, %v167, 0.0
  %v184 = vsel %vm123, %v168, 0.0
  %v185 = vadd.s32 %v43, 1
  %vm186 = vcmp.ge.s32.totalorder %v185, 0
  %vm187 = vcmp.lt.s32.totalorder %v185, 128
  %vm188 = vmand %vm186, %vm187
  %v189 = vsel %vm188, 1, 0
  %v190 = vlaneseq
  %v191 = vshrl.u32 %v190, 7
  %v192 = vsub.s32 0, %v191
  %v193 = vrot.slane %v189, %v192
  %v194 = vlaneseq
  %v195 = vshrl.u32 %v194, 7
  %v196 = vsub.s32 1, %v195
  %v197 = vrot.slane %v189, %v196
  %vm198 = vcmp.eq.s32.totalorder %v193, 1
  %vm199 = vcmp.eq.s32.totalorder %v197, 1
  %200 = vrot.lane.b32.xlu0 %v97, 125
  %v201 = vpop.permute.xlu0 %200
  %202 = vrot.lane.b32.xlu0 %v98, 125
  %v203 = vpop.permute.xlu0 %202
  %204 = vrot.lane.b32.xlu0 %v99, 125
  %v205 = vpop.permute.xlu0 %204
  %206 = vrot.lane.b32.xlu0 %v100, 125
  %v207 = vpop.permute.xlu0 %206
  %208 = vrot.lane.b32.xlu0 %v101, 125
  %v209 = vpop.permute.xlu0 %208
  %210 = vrot.lane.b32.xlu0 %v102, 125
  %v211 = vpop.permute.xlu0 %210
  %212 = vrot.lane.b32.xlu0 %v103, 125
  %v213 = vpop.permute.xlu0 %212
  %214 = vrot.lane.b32.xlu0 %v104, 125
  %v215 = vpop.permute.xlu0 %214
  %216 = vrot.lane.b32.xlu0 %v105, 125
  %v217 = vpop.permute.xlu0 %216
  %218 = vrot.lane.b32.xlu0 %v106, 125
  %v219 = vpop.permute.xlu0 %218
  %220 = vrot.lane.b32.xlu0 %v107, 125
  %v221 = vpop.permute.xlu0 %220
  %222 = vrot.lane.b32.xlu0 %v108, 125
  %v223 = vpop.permute.xlu0 %222
  %vm224 = vcmask 1022976
  %v225 = vsel %vm224, %v201, %v203
  %v226 = vsel %vm224, %v203, %v205
  %v227 = vsel %vm224, %v207, %v209
  %v228 = vsel %vm224, %v209, %v211
  %v229 = vsel %vm224, %v213, %v215
  %v230 = vsel %vm224, %v215, %v217
  %v231 = vsel %vm224, %v219, %v221
  %v232 = vsel %vm224, %v221, %v223
  %v241 = vsel %vm198, %v225, 0.0
  %v242 = vsel %vm199, %v226, 0.0
  %v243 = vsel %vm198, %v227, 0.0
  %v244 = vsel %vm199, %v228, 0.0
  %v245 = vsel %vm198, %v229, 0.0
  %v246 = vsel %vm199, %v230, 0.0
  %v247 = vsel %vm198, %v231, 0.0
  %v248 = vsel %vm199, %v232, 0.0
  %249 = vrot.lane.b32.xlu0 %v97, 126
  %v250 = vpop.permute.xlu0 %249
  %251 = vrot.lane.b32.xlu0 %v98, 126
  %v252 = vpop.permute.xlu0 %251
  %253 = vrot.lane.b32.xlu0 %v99, 126
  %v254 = vpop.permute.xlu0 %253
  %255 = vrot.lane.b32.xlu0 %v100, 126
  %v256 = vpop.permute.xlu0 %255
  %257 = vrot.lane.b32.xlu0 %v101, 126
  %v258 = vpop.permute.xlu0 %257
  %259 = vrot.lane.b32.xlu0 %v102, 126
  %v260 = vpop.permute.xlu0 %259
  %261 = vrot.lane.b32.xlu0 %v103, 126
  %v262 = vpop.permute.xlu0 %261
  %263 = vrot.lane.b32.xlu0 %v104, 126
  %v264 = vpop.permute.xlu0 %263
  %265 = vrot.lane.b32.xlu0 %v105, 126
  %v266 = vpop.permute.xlu0 %265
  %267 = vrot.lane.b32.xlu0 %v106, 126
  %v268 = vpop.permute.xlu0 %267
  %269 = vrot.lane.b32.xlu0 %v107, 126
  %v270 = vpop.permute.xlu0 %269
  %271 = vrot.lane.b32.xlu0 %v108, 126
  %v272 = vpop.permute.xlu0 %271
  %vm273 = vcmask 1031168
  %v274 = vsel %vm273, %v250, %v252
  %v275 = vsel %vm273, %v252, %v254
  %v276 = vsel %vm273, %v256, %v258
  %v277 = vsel %vm273, %v258, %v260
  %v278 = vsel %vm273, %v262, %v264
  %v279 = vsel %vm273, %v264, %v266
  %v280 = vsel %vm273, %v268, %v270
  %v281 = vsel %vm273, %v270, %v272
  %v290 = vld [vmem:[%s2] sm:$0xff]
  %v291 = vld [vmem:[%s2 + $0x8] sm:$0xff]
  %v292 = vld [vmem:[%s2 + $0x10] sm:$0xff]
  %v293 = vld [vmem:[%s2 + $0x18] sm:$0xff]
  %v294 = vld [vmem:[%s2 + $0x20] sm:$0xff]
  %v295 = vld [vmem:[%s2 + $0x28] sm:$0xff]
  %v296 = vld [vmem:[%s2 + $0x30] sm:$0xff]
  %v297 = vld [vmem:[%s2 + $0x38] sm:$0xff]
  %v298 = vld [vmem:[%s3] sm:$0xff]
  %v299 = vld [vmem:[%s3 + $0x8] sm:$0xff]
  %v300 = vld [vmem:[%s3 + $0x10] sm:$0xff]
  %v301 = vld [vmem:[%s3 + $0x18] sm:$0xff]
  %v302 = vld [vmem:[%s3 + $0x20] sm:$0xff]
  %v303 = vld [vmem:[%s3 + $0x28] sm:$0xff]
  %v304 = vld [vmem:[%s3 + $0x30] sm:$0xff]
  %v305 = vld [vmem:[%s3 + $0x38] sm:$0xff]
  %307 = vset.pattern.permute.xlu0 0
  %308 = vperm.xlu0 %307, %v298
  %v309 = vpop.permute.xlu0 %308
  %312 = vset.pattern.permute.xlu0 0
  %313 = vperm.xlu0 %312, %v299
  %v314 = vpop.permute.xlu0 %313
  %317 = vset.pattern.permute.xlu0 0
  %318 = vperm.xlu0 %317, %v300
  %v319 = vpop.permute.xlu0 %318
  %322 = vset.pattern.permute.xlu0 0
  %323 = vperm.xlu0 %322, %v301
  %v324 = vpop.permute.xlu0 %323
  %327 = vset.pattern.permute.xlu0 0
  %328 = vperm.xlu0 %327, %v302
  %v329 = vpop.permute.xlu0 %328
  %332 = vset.pattern.permute.xlu0 0
  %333 = vperm.xlu0 %332, %v303
  %v334 = vpop.permute.xlu0 %333
  %337 = vset.pattern.permute.xlu0 0
  %338 = vperm.xlu0 %337, %v304
  %v339 = vpop.permute.xlu0 %338
  %342 = vset.pattern.permute.xlu0 0
  %343 = vperm.xlu0 %342, %v305
  %v344 = vpop.permute.xlu0 %343
  %vm346 = vcmask 785408
  %v348 = vsel %vm346, %v290, 0
  %v351 = vsel %vm346, %v291, 0
  %v354 = vsel %vm346, %v292, 0
  %v357 = vsel %vm346, %v293, 0
  %v360 = vsel %vm346, %v294, 0
  %v363 = vsel %vm346, %v295, 0
  %v366 = vsel %vm346, %v296, 0
  %v369 = vsel %vm346, %v297, 0
  %371 = vmatprep.subr.mxu0 %v178
  %372 = vmatpush1.msra.mxu0 %v177
  %373 = vmatprep.subr.mxu0 %v180
  %374 = vmatpush1.msra.mxu0 %v179
  %375 = vmatprep.subr.mxu0 %v182
  %376 = vmatpush1.msra.mxu0 %v181
  %377 = vmatprep.subr.mxu0 %v184
  %378 = vmatpush1.msra.mxu0 %v183
  %379 = vmatprep.subr.mxu0 %v275
  %380 = vmatpush1.msra.mxu0 %v274
  %381 = vmatprep.subr.mxu0 %v277
  %382 = vmatpush1.msra.mxu0 %v276
  %383 = vmatprep.subr.mxu0 %v279
  %384 = vmatpush1.msra.mxu0 %v278
  %385 = vmatprep.subr.mxu0 %v281
  %386 = vmatpush1.msra.mxu0 %v280
  %387 = vmatprep.subr.mxu0 %v242
  %388 = vmatpush1.msra.mxu0 %v241
  %389 = vmatprep.subr.mxu0 %v244
  %390 = vmatpush1.msra.mxu0 %v243
  %391 = vmatprep.subr.mxu0 %v246
  %392 = vmatpush1.msra.mxu0 %v245
  %393 = vmatprep.subr.mxu0 %v248
  %394 = vmatpush1.msra.mxu0 %v247
  %395 = vmatprep.subr.mxu0 0.0
  %396 = vmatpush1.msra.mxu0 0.0
  %397 = vmatprep.subr.mxu0 0.0
  %398 = vmatpush1.msra.mxu0 0.0
  %399 = vmatprep.subr.mxu0 0.0
  %400 = vmatpush1.msra.mxu0 0.0
  %401 = vmatprep.subr.mxu0 0.0
  %402 = vmatpush1.msra.mxu0 0.0
  %403 = vmatprep.subr.mxu0 0.0
  %404 = vmatpush1.msra.mxu0 0.0
  %405 = vmatprep.subr.mxu0 0.0
  %406 = vmatpush1.msra.mxu0 0.0
  %407 = vmatprep.subr.mxu0 0.0
  %408 = vmatpush1.msra.mxu0 0.0
  %409 = vmatprep.subr.mxu0 0.0
  %410 = vmatpush1.msra.mxu0 0.0
  %411 = vmatprep.subr.mxu0 0.0
  %412 = vmatpush1.msra.mxu0 0.0
  %413 = vmatprep.subr.mxu0 0.0
  %414 = vmatpush1.msra.mxu0 0.0
  %415 = vmatprep.subr.mxu0 0.0
  %416 = vmatpush1.msra.mxu0 0.0
  %417 = vmatprep.subr.mxu0 0.0
  %418 = vmatpush1.msra.mxu0 0.0
  %419 = vmatprep.subr.mxu0 0.0
  %420 = vmatpush1.msra.mxu0 0.0
  %421 = vmatprep.subr.mxu0 0.0
  %422 = vmatpush1.msra.mxu0 0.0
  %423 = vmatprep.subr.mxu0 0.0
  %424 = vmatpush1.msra.mxu0 0.0
  %425 = vmatprep.subr.mxu0 0.0
  %426 = vmatpush1.msra.mxu0 0.0
  %427 = vmatprep.subr.mxu0 0.0
  %428 = vmatpush1.msra.mxu0 0.0
  %429 = vmatprep.subr.mxu0 0.0
  %430 = vmatpush1.msra.mxu0 0.0
  %431 = vmatprep.subr.mxu0 0.0
  %432 = vmatpush1.msra.mxu0 0.0
  %433 = vmatprep.subr.mxu0 0.0
  %434 = vmatpush1.msra.mxu0 0.0
  %435 = vmatprep.mubr.f32.mxu0 0.0
  %436 = vmatmul.mubr.f32.gmra.mrb[0].mxu0 %v348
  %v437 = vpop.f32.mrb[0].mxu0
  %v438 = vadd.f32 %v309, %v437
  %v439 = vpop.f32.mrb[0].mxu0
  %v440 = vadd.f32 %v309, %v439
  %441 = vmatprep.mubr.f32.mxu0 0.0
  %442 = vmatmul.mubr.f32.gmra.mrb[0].mxu0 %v351
  %v443 = vpop.f32.mrb[0].mxu0
  %v444 = vadd.f32 %v314, %v443
  %v445 = vpop.f32.mrb[0].mxu0
  %v446 = vadd.f32 %v314, %v445
  %447 = vmatprep.mubr.f32.mxu0 0.0
  %448 = vmatmul.mubr.f32.gmra.mrb[0].mxu0 %v354
  %v449 = vpop.f32.mrb[0].mxu0
  %v450 = vadd.f32 %v319, %v449
  %v451 = vpop.f32.mrb[0].mxu0
  %v452 = vadd.f32 %v319, %v451
  %453 = vmatprep.mubr.f32.mxu0 0.0
  %454 = vmatmul.mubr.f32.gmra.mrb[0].mxu0 %v357
  %v455 = vpop.f32.mrb[0].mxu0
  %v456 = vadd.f32 %v324, %v455
  %v457 = vpop.f32.mrb[0].mxu0
  %v458 = vadd.f32 %v324, %v457
  %459 = vmatprep.mubr.f32.mxu0 0.0
  %460 = vmatmul.mubr.f32.gmra.mrb[0].mxu0 %v360
  %v461 = vpop.f32.mrb[0].mxu0
  %v462 = vadd.f32 %v329, %v461
  %v463 = vpop.f32.mrb[0].mxu0
  %v464 = vadd.f32 %v329, %v463
  %465 = vmatprep.mubr.f32.mxu0 0.0
  %466 = vmatmul.mubr.f32.gmra.mrb[0].mxu0 %v363
  %v467 = vpop.f32.mrb[0].mxu0
  %v468 = vadd.f32 %v334, %v467
  %v469 = vpop.f32.mrb[0].mxu0
  %v470 = vadd.f32 %v334, %v469
  %471 = vmatprep.mubr.f32.mxu0 0.0
  %472 = vmatmul.mubr.f32.gmra.mrb[0].mxu0 %v366
  %v473 = vpop.f32.mrb[0].mxu0
  %v474 = vadd.f32 %v339, %v473
  %v475 = vpop.f32.mrb[0].mxu0
  %v476 = vadd.f32 %v339, %v475
  %477 = vmatprep.mubr.f32.mxu0 0.0
  %478 = vmatmul.mubr.f32.gmra.mrb[0].mxu0 %v369
  %v479 = vpop.f32.mrb[0].mxu0
  %v480 = vadd.f32 %v344, %v479
  %v481 = vpop.f32.mrb[0].mxu0
  %v482 = vadd.f32 %v344, %v481
  %483 = vdwg.mxu0
  %v484 = vtanh.pop %v438
  %v485 = vtanh.pop %v440
  %v486 = vtanh.pop %v444
  %v487 = vtanh.pop %v446
  %v488 = vtanh.pop %v450
  %v489 = vtanh.pop %v452
  %v490 = vtanh.pop %v456
  %v491 = vtanh.pop %v458
  %v492 = vmul.f32 %v462, 0.5
  %v493 = vmul.f32 %v464, 0.5
  %v494 = vmul.f32 %v468, 0.5
  %v495 = vmul.f32 %v470, 0.5
  %v496 = vmul.f32 %v474, 0.5
  %v497 = vmul.f32 %v476, 0.5
  %v498 = vmul.f32 %v480, 0.5
  %v499 = vmul.f32 %v482, 0.5
  %v500 = vtanh.pop %v492
  %v501 = vtanh.pop %v493
  %v502 = vtanh.pop %v494
  %v503 = vtanh.pop %v495
  %v504 = vtanh.pop %v496
  %v505 = vtanh.pop %v497
  %v506 = vtanh.pop %v498
  %v507 = vtanh.pop %v499
  %v508 = vmul.f32 %v500, 0.5
  %v509 = vmul.f32 %v501, 0.5
  %v510 = vmul.f32 %v502, 0.5
  %v511 = vmul.f32 %v503, 0.5
  %v512 = vmul.f32 %v504, 0.5
  %v513 = vmul.f32 %v505, 0.5
  %v514 = vmul.f32 %v506, 0.5
  %v515 = vmul.f32 %v507, 0.5
  %v516 = vadd.f32 %v508, 0.5
  %v517 = vadd.f32 %v509, 0.5
  %v518 = vadd.f32 %v510, 0.5
  %v519 = vadd.f32 %v511, 0.5
  %v520 = vadd.f32 %v512, 0.5
  %v521 = vadd.f32 %v513, 0.5
  %v522 = vadd.f32 %v514, 0.5
  %v523 = vadd.f32 %v515, 0.5
  %v524 = vmul.f32 %v484, %v516
  %v525 = vmul.f32 %v485, %v517
  %v526 = vmul.f32 %v486, %v518
  %v527 = vmul.f32 %v487, %v519
  %v528 = vmul.f32 %v488, %v520
  %v529 = vmul.f32 %v489, %v521
  %v530 = vmul.f32 %v490, %v522
  %v531 = vmul.f32 %v491, %v523
  %v532 = vld [vmem:[%s4] sm:$0xff]
  %v533 = vld [vmem:[%s4 + $0x8] sm:$0xff]
  %v534 = vld [vmem:[%s4 + $0x10] sm:$0xff]
  %v535 = vld [vmem:[%s4 + $0x18] sm:$0xff]
  %v536 = vld [vmem:[%s4 + $0x20] sm:$0xff]
  %v537 = vld [vmem:[%s4 + $0x28] sm:$0xff]
  %v538 = vld [vmem:[%s4 + $0x30] sm:$0xff]
  %v539 = vld [vmem:[%s4 + $0x38] sm:$0xff]
  %v540 = vld [vmem:[%s4 + $0x40] sm:$0xff]
  %v541 = vld [vmem:[%s4 + $0x48] sm:$0xff]
  %v542 = vld [vmem:[%s4 + $0x50] sm:$0xff]
  %v543 = vld [vmem:[%s4 + $0x58] sm:$0xff]
  %v544 = vld [vmem:[%s5] sm:$0xff]
  %v545 = vld [vmem:[%s5 + $0x8] sm:$0xff]
  %v546 = vld [vmem:[%s5 + $0x10] sm:$0xff]
  %v547 = vld [vmem:[%s5 + $0x18] sm:$0xff]
  %v548 = vld [vmem:[%s5 + $0x20] sm:$0xff]
  %v549 = vld [vmem:[%s5 + $0x28] sm:$0xff]
  %v550 = vld [vmem:[%s5 + $0x30] sm:$0xff]
  %v551 = vld [vmem:[%s5 + $0x38] sm:$0xff]
  %v552 = vld [vmem:[%s5 + $0x40] sm:$0xff]
  %v553 = vld [vmem:[%s5 + $0x48] sm:$0xff]
  %v554 = vld [vmem:[%s5 + $0x50] sm:$0xff]
  %v555 = vld [vmem:[%s5 + $0x58] sm:$0xff]
  %557 = vset.pattern.permute.xlu0 0
  %558 = vperm.xlu0 %557, %v544
  %v559 = vpop.permute.xlu0 %558
  %562 = vset.pattern.permute.xlu0 0
  %563 = vperm.xlu0 %562, %v545
  %v564 = vpop.permute.xlu0 %563
  %567 = vset.pattern.permute.xlu0 0
  %568 = vperm.xlu0 %567, %v546
  %v569 = vpop.permute.xlu0 %568
  %572 = vset.pattern.permute.xlu0 0
  %573 = vperm.xlu0 %572, %v547
  %v574 = vpop.permute.xlu0 %573
  %577 = vset.pattern.permute.xlu0 0
  %578 = vperm.xlu0 %577, %v548
  %v579 = vpop.permute.xlu0 %578
  %582 = vset.pattern.permute.xlu0 0
  %583 = vperm.xlu0 %582, %v549
  %v584 = vpop.permute.xlu0 %583
  %587 = vset.pattern.permute.xlu0 0
  %588 = vperm.xlu0 %587, %v550
  %v589 = vpop.permute.xlu0 %588
  %592 = vset.pattern.permute.xlu0 0
  %593 = vperm.xlu0 %592, %v551
  %v594 = vpop.permute.xlu0 %593
  %597 = vset.pattern.permute.xlu0 0
  %598 = vperm.xlu0 %597, %v552
  %v599 = vpop.permute.xlu0 %598
  %602 = vset.pattern.permute.xlu0 0
  %603 = vperm.xlu0 %602, %v553
  %v604 = vpop.permute.xlu0 %603
  %607 = vset.pattern.permute.xlu0 0
  %608 = vperm.xlu0 %607, %v554
  %v609 = vpop.permute.xlu0 %608
  %612 = vset.pattern.permute.xlu0 0
  %613 = vperm.xlu0 %612, %v555
  %v614 = vpop.permute.xlu0 %613
  %vm616 = vcmask 261120
  %v618 = vsel %vm616, %v532, 0
  %v621 = vsel %vm616, %v533, 0
  %v624 = vsel %vm616, %v534, 0
  %v627 = vsel %vm616, %v535, 0
  %v630 = vsel %vm616, %v536, 0
  %v633 = vsel %vm616, %v537, 0
  %v636 = vsel %vm616, %v538, 0
  %v639 = vsel %vm616, %v539, 0
  %v642 = vsel %vm616, %v540, 0
  %v645 = vsel %vm616, %v541, 0
  %v648 = vsel %vm616, %v542, 0
  %v651 = vsel %vm616, %v543, 0
  %653 = vmatprep.subr.mxu0 %v525
  %654 = vmatpush1.msra.mxu0 %v524
  %655 = vmatprep.subr.mxu0 %v527
  %656 = vmatpush1.msra.mxu0 %v526
  %657 = vmatprep.subr.mxu0 %v529
  %658 = vmatpush1.msra.mxu0 %v528
  %659 = vmatprep.subr.mxu0 %v531
  %660 = vmatpush1.msra.mxu0 %v530
  %661 = vmatprep.subr.mxu0 0.0
  %662 = vmatpush1.msra.mxu0 0.0
  %663 = vmatprep.subr.mxu0 0.0
  %664 = vmatpush1.msra.mxu0 0.0
  %665 = vmatprep.subr.mxu0 0.0
  %666 = vmatpush1.msra.mxu0 0.0
  %667 = vmatprep.subr.mxu0 0.0
  %668 = vmatpush1.msra.mxu0 0.0
  %669 = vmatprep.subr.mxu0 0.0
  %670 = vmatpush1.msra.mxu0 0.0
  %671 = vmatprep.subr.mxu0 0.0
  %672 = vmatpush1.msra.mxu0 0.0
  %673 = vmatprep.subr.mxu0 0.0
  %674 = vmatpush1.msra.mxu0 0.0
  %675 = vmatprep.subr.mxu0 0.0
  %676 = vmatpush1.msra.mxu0 0.0
  %677 = vmatprep.subr.mxu0 0.0
  %678 = vmatpush1.msra.mxu0 0.0
  %679 = vmatprep.subr.mxu0 0.0
  %680 = vmatpush1.msra.mxu0 0.0
  %681 = vmatprep.subr.mxu0 0.0
  %682 = vmatpush1.msra.mxu0 0.0
  %683 = vmatprep.subr.mxu0 0.0
  %684 = vmatpush1.msra.mxu0 0.0
  %685 = vmatprep.subr.mxu0 0.0
  %686 = vmatpush1.msra.mxu0 0.0
  %687 = vmatprep.subr.mxu0 0.0
  %688 = vmatpush1.msra.mxu0 0.0
  %689 = vmatprep.subr.mxu0 0.0
  %690 = vmatpush1.msra.mxu0 0.0
  %691 = vmatprep.subr.mxu0 0.0
  %692 = vmatpush1.msra.mxu0 0.0
  %693 = vmatprep.subr.mxu0 0.0
  %694 = vmatpush1.msra.mxu0 0.0
  %695 = vmatprep.subr.mxu0 0.0
  %696 = vmatpush1.msra.mxu0 0.0
  %697 = vmatprep.subr.mxu0 0.0
  %698 = vmatpush1.msra.mxu0 0.0
  %699 = vmatprep.subr.mxu0 0.0
  %700 = vmatpush1.msra.mxu0 0.0
  %701 = vmatprep.subr.mxu0 0.0
  %702 = vmatpush1.msra.mxu0 0.0
  %703 = vmatprep.subr.mxu0 0.0
  %704 = vmatpush1.msra.mxu0 0.0
  %705 = vmatprep.subr.mxu0 0.0
  %706 = vmatpush1.msra.mxu0 0.0
  %707 = vmatprep.subr.mxu0 0.0
  %708 = vmatpush1.msra.mxu0 0.0
  %709 = vmatprep.subr.mxu0 0.0
  %710 = vmatpush1.msra.mxu0 0.0
  %711 = vmatprep.subr.mxu0 0.0
  %712 = vmatpush1.msra.mxu0 0.0
  %713 = vmatprep.subr.mxu0 0.0
  %714 = vmatpush1.msra.mxu0 0.0
  %715 = vmatprep.subr.mxu0 0.0
  %716 = vmatpush1.msra.mxu0 0.0
  %717 = vmatprep.mubr.f32.mxu0 0.0
  %718 = vmatmul.mubr.f32.gmra.mrb[0].mxu0 %v618
  %v719 = vpop.f32.mrb[0].mxu0
  %v720 = vadd.f32 %v559, %v719
  %v721 = vpop.f32.mrb[0].mxu0
  %v722 = vadd.f32 %v559, %v721
  %723 = vmatprep.mubr.f32.mxu0 0.0
  %724 = vmatmul.mubr.f32.gmra.mrb[0].mxu0 %v621
  %v725 = vpop.f32.mrb[0].mxu0
  %v726 = vadd.f32 %v564, %v725
  %v727 = vpop.f32.mrb[0].mxu0
  %v728 = vadd.f32 %v564, %v727
  %729 = vmatprep.mubr.f32.mxu0 0.0
  %730 = vmatmul.mubr.f32.gmra.mrb[0].mxu0 %v624
  %v731 = vpop.f32.mrb[0].mxu0
  %v732 = vadd.f32 %v569, %v731
  %v733 = vpop.f32.mrb[0].mxu0
  %v734 = vadd.f32 %v569, %v733
  %735 = vmatprep.mubr.f32.mxu0 0.0
  %736 = vmatmul.mubr.f32.gmra.mrb[0].mxu0 %v627
  %v737 = vpop.f32.mrb[0].mxu0
  %v738 = vadd.f32 %v574, %v737
  %v739 = vpop.f32.mrb[0].mxu0
  %v740 = vadd.f32 %v574, %v739
  %741 = vmatprep.mubr.f32.mxu0 0.0
  %742 = vmatmul.mubr.f32.gmra.mrb[0].mxu0 %v630
  %v743 = vpop.f32.mrb[0].mxu0
  %v744 = vadd.f32 %v579, %v743
  %v745 = vpop.f32.mrb[0].mxu0
  %v746 = vadd.f32 %v579, %v745
  %747 = vmatprep.mubr.f32.mxu0 0.0
  %748 = vmatmul.mubr.f32.gmra.mrb[0].mxu0 %v633
  %v749 = vpop.f32.mrb[0].mxu0
  %v750 = vadd.f32 %v584, %v749
  %v751 = vpop.f32.mrb[0].mxu0
  %v752 = vadd.f32 %v584, %v751
  %753 = vmatprep.mubr.f32.mxu0 0.0
  %754 = vmatmul.mubr.f32.gmra.mrb[0].mxu0 %v636
  %v755 = vpop.f32.mrb[0].mxu0
  %v756 = vadd.f32 %v589, %v755
  %v757 = vpop.f32.mrb[0].mxu0
  %v758 = vadd.f32 %v589, %v757
  %759 = vmatprep.mubr.f32.mxu0 0.0
  %760 = vmatmul.mubr.f32.gmra.mrb[0].mxu0 %v639
  %v761 = vpop.f32.mrb[0].mxu0
  %v762 = vadd.f32 %v594, %v761
  %v763 = vpop.f32.mrb[0].mxu0
  %v764 = vadd.f32 %v594, %v763
  %765 = vmatprep.mubr.f32.mxu0 0.0
  %766 = vmatmul.mubr.f32.gmra.mrb[0].mxu0 %v642
  %v767 = vpop.f32.mrb[0].mxu0
  %v768 = vadd.f32 %v599, %v767
  %v769 = vpop.f32.mrb[0].mxu0
  %v770 = vadd.f32 %v599, %v769
  %771 = vmatprep.mubr.f32.mxu0 0.0
  %772 = vmatmul.mubr.f32.gmra.mrb[0].mxu0 %v645
  %v773 = vpop.f32.mrb[0].mxu0
  %v774 = vadd.f32 %v604, %v773
  %v775 = vpop.f32.mrb[0].mxu0
  %v776 = vadd.f32 %v604, %v775
  %777 = vmatprep.mubr.f32.mxu0 0.0
  %778 = vmatmul.mubr.f32.gmra.mrb[0].mxu0 %v648
  %v779 = vpop.f32.mrb[0].mxu0
  %v780 = vadd.f32 %v609, %v779
  %v781 = vpop.f32.mrb[0].mxu0
  %v782 = vadd.f32 %v609, %v781
  %783 = vmatprep.mubr.f32.mxu0 0.0
  %784 = vmatmul.mubr.f32.gmra.mrb[0].mxu0 %v651
  %v785 = vpop.f32.mrb[0].mxu0
  %v786 = vadd.f32 %v614, %v785
  %v787 = vpop.f32.mrb[0].mxu0
  %v788 = vadd.f32 %v614, %v787
  %789 = vdwg.mxu0
  %v790 = vadd.f32 %v720, %v35
  %v791 = vadd.f32 %v722, %v36
  %v792 = vadd.f32 %v726, %v37
  %v793 = vadd.f32 %v728, %v38
  %v794 = vadd.f32 %v732, %v39
  %v795 = vadd.f32 %v734, %v40
  %v796 = vadd.f32 %v738, %v41
  %v797 = vadd.f32 %v740, %v42
  %798 = vst [vmem:[%s7] sm:$0xff] %v744
  %799 = vst [vmem:[%s7 + $0x8] sm:$0xff] %v746
  %800 = vst [vmem:[%s7 + $0x10] sm:$0xff] %v750
  %801 = vst [vmem:[%s7 + $0x18] sm:$0xff] %v752
  %802 = vst [vmem:[%s7 + $0x20] sm:$0xff] %v756
  %803 = vst [vmem:[%s7 + $0x28] sm:$0xff] %v758
  %804 = vst [vmem:[%s7 + $0x30] sm:$0xff] %v762
  %805 = vst [vmem:[%s7 + $0x38] sm:$0xff] %v764
  %806 = vst [vmem:[%s7 + $0x40] sm:$0xff] %v768
  %807 = vst [vmem:[%s7 + $0x48] sm:$0xff] %v770
  %808 = vst [vmem:[%s7 + $0x50] sm:$0xff] %v774
  %809 = vst [vmem:[%s7 + $0x58] sm:$0xff] %v776
  %810 = vst [vmem:[%s7 + $0x60] sm:$0xff] %v780
  %811 = vst [vmem:[%s7 + $0x68] sm:$0xff] %v782
  %812 = vst [vmem:[%s7 + $0x70] sm:$0xff] %v786
  %813 = vst [vmem:[%s7 + $0x78] sm:$0xff] %v788
  %822 = vrot.lane.b32.xlu0 %v790, 2
  %v823 = vpop.permute.xlu0 %822
  %824 = vrot.lane.b32.xlu0 %v791, 2
  %v825 = vpop.permute.xlu0 %824
  %826 = vrot.lane.b32.xlu0 %v792, 2
  %v827 = vpop.permute.xlu0 %826
  %828 = vrot.lane.b32.xlu0 %v793, 2
  %v829 = vpop.permute.xlu0 %828
  %830 = vrot.lane.b32.xlu0 %v794, 2
  %v831 = vpop.permute.xlu0 %830
  %832 = vrot.lane.b32.xlu0 %v795, 2
  %v833 = vpop.permute.xlu0 %832
  %834 = vrot.lane.b32.xlu0 %v796, 2
  %v835 = vpop.permute.xlu0 %834
  %836 = vrot.lane.b32.xlu0 %v797, 2
  %v837 = vpop.permute.xlu0 %836
  %v838 = vsel %vm25, %v823, %v825
  %v839 = vsel %vm25, %v827, %v829
  %v840 = vsel %vm25, %v831, %v833
  %v841 = vsel %vm25, %v835, %v837
  %854 = vst.msk [vmem:[#allocation2] sm:$0xff] %vm84, %v823
  %855 = vst [vmem:[#allocation2 + $0x8] sm:$0xff] %v838
  %856 = vst.msk [vmem:[#allocation2 + $0x10] sm:$0xff] %vm25, %v825
  %857 = vst.msk [vmem:[#allocation2 + $0x18] sm:$0xff] %vm84, %v827
  %858 = vst [vmem:[#allocation2 + $0x20] sm:$0xff] %v839
  %859 = vst.msk [vmem:[#allocation2 + $0x28] sm:$0xff] %vm25, %v829
  %860 = vst.msk [vmem:[#allocation2 + $0x30] sm:$0xff] %vm84, %v831
  %861 = vst [vmem:[#allocation2 + $0x38] sm:$0xff] %v840
  %862 = vst.msk [vmem:[#allocation2 + $0x40] sm:$0xff] %vm25, %v833
  %863 = vst.msk [vmem:[#allocation2 + $0x48] sm:$0xff] %vm84, %v835
  %864 = vst [vmem:[#allocation2 + $0x50] sm:$0xff] %v841
  %865 = vst.msk [vmem:[#allocation2 + $0x58] sm:$0xff] %vm25, %v837
  %v866 = vld [vmem:[#allocation2] sm:$0xff]
  %v867 = vld [vmem:[#allocation2 + $0x8] sm:$0xff]
  %v868 = vld [vmem:[#allocation2 + $0x18] sm:$0xff]
  %v869 = vld [vmem:[#allocation2 + $0x20] sm:$0xff]
  %v870 = vld [vmem:[#allocation2 + $0x30] sm:$0xff]
  %v871 = vld [vmem:[#allocation2 + $0x38] sm:$0xff]
  %v872 = vld [vmem:[#allocation2 + $0x48] sm:$0xff]
  %v873 = vld [vmem:[#allocation2 + $0x50] sm:$0xff]
  %v874 = vadd.s32 %v43, 4294967294
  %vm875 = vcmp.ge.s32.totalorder %v874, 0
  %vm876 = vcmp.lt.s32.totalorder %v874, 128
  %vm877 = vmand %vm875, %vm876
  %v878 = vsel %vm877, 1, 0
  %v879 = vlaneseq
  %v880 = vshrl.u32 %v879, 7
  %v881 = vsub.s32 0, %v880
  %v882 = vrot.slane %v878, %v881
  %v883 = vlaneseq
  %v884 = vshrl.u32 %v883, 7
  %v885 = vsub.s32 1, %v884
  %v886 = vrot.slane %v878, %v885
  %vm887 = vcmp.eq.s32.totalorder %v882, 1
  %vm888 = vcmp.eq.s32.totalorder %v886, 1
  %v889 = vsel %vm887, %v866, 0.0
  %v890 = vsel %vm888, %v867, 0.0
  %v891 = vsel %vm887, %v868, 0.0
  %v892 = vsel %vm888, %v869, 0.0
  %v893 = vsel %vm887, %v870, 0.0
  %v894 = vsel %vm888, %v871, 0.0
  %v895 = vsel %vm887, %v872, 0.0
  %v896 = vsel %vm888, %v873, 0.0
  %v897 = vld [vmem:[#allocation2 + $0x10] sm:$0xff]
  %v898 = vld [vmem:[#allocation2 + $0x28] sm:$0xff]
  %v899 = vld [vmem:[#allocation2 + $0x40] sm:$0xff]
  %v900 = vld [vmem:[#allocation2 + $0x58] sm:$0xff]
  %v901 = vadd.s32 %v43, 2
  %vm902 = vcmp.ge.s32.totalorder %v901, 0
  %vm903 = vcmp.lt.s32.totalorder %v901, 128
  %vm904 = vmand %vm902, %vm903
  %v905 = vsel %vm904, 1, 0
  %v906 = vlaneseq
  %v907 = vshrl.u32 %v906, 7
  %v908 = vsub.s32 0, %v907
  %v909 = vrot.slane %v905, %v908
  %v910 = vlaneseq
  %v911 = vshrl.u32 %v910, 7
  %v912 = vsub.s32 1, %v911
  %v913 = vrot.slane %v905, %v912
  %vm914 = vcmp.eq.s32.totalorder %v909, 1
  %vm915 = vcmp.eq.s32.totalorder %v913, 1
  %928 = vrot.lane.b32.xlu0 %v866, 124
  %v929 = vpop.permute.xlu0 %928
  %930 = vrot.lane.b32.xlu0 %v867, 124
  %v931 = vpop.permute.xlu0 %930
  %932 = vrot.lane.b32.xlu0 %v897, 124
  %v933 = vpop.permute.xlu0 %932
  %934 = vrot.lane.b32.xlu0 %v868, 124
  %v935 = vpop.permute.xlu0 %934
  %936 = vrot.lane.b32.xlu0 %v869, 124
  %v937 = vpop.permute.xlu0 %936
  %938 = vrot.lane.b32.xlu0 %v898, 124
  %v939 = vpop.permute.xlu0 %938
  %940 = vrot.lane.b32.xlu0 %v870, 124
  %v941 = vpop.permute.xlu0 %940
  %942 = vrot.lane.b32.xlu0 %v871, 124
  %v943 = vpop.permute.xlu0 %942
  %944 = vrot.lane.b32.xlu0 %v899, 124
  %v945 = vpop.permute.xlu0 %944
  %946 = vrot.lane.b32.xlu0 %v872, 124
  %v947 = vpop.permute.xlu0 %946
  %948 = vrot.lane.b32.xlu0 %v873, 124
  %v949 = vpop.permute.xlu0 %948
  %950 = vrot.lane.b32.xlu0 %v900, 124
  %v951 = vpop.permute.xlu0 %950
  %vm952 = vcmask 1014784
  %v953 = vsel %vm952, %v929, %v931
  %v954 = vsel %vm952, %v931, %v933
  %v955 = vsel %vm952, %v935, %v937
  %v956 = vsel %vm952, %v937, %v939
  %v957 = vsel %vm952, %v941, %v943
  %v958 = vsel %vm952, %v943, %v945
  %v959 = vsel %vm952, %v947, %v949
  %v960 = vsel %vm952, %v949, %v951
  %v969 = vsel %vm914, %v953, 0.0
  %v970 = vsel %vm915, %v954, 0.0
  %v971 = vsel %vm914, %v955, 0.0
  %v972 = vsel %vm915, %v956, 0.0
  %v973 = vsel %vm914, %v957, 0.0
  %v974 = vsel %vm915, %v958, 0.0
  %v975 = vsel %vm914, %v959, 0.0
  %v976 = vsel %vm915, %v960, 0.0
  %977 = vrot.lane.b32.xlu0 %v866, 126
  %v978 = vpop.permute.xlu0 %977
  %979 = vrot.lane.b32.xlu0 %v867, 126
  %v980 = vpop.permute.xlu0 %979
  %981 = vrot.lane.b32.xlu0 %v897, 126
  %v982 = vpop.permute.xlu0 %981
  %983 = vrot.lane.b32.xlu0 %v868, 126
  %v984 = vpop.permute.xlu0 %983
  %985 = vrot.lane.b32.xlu0 %v869, 126
  %v986 = vpop.permute.xlu0 %985
  %987 = vrot.lane.b32.xlu0 %v898, 126
  %v988 = vpop.permute.xlu0 %987
  %989 = vrot.lane.b32.xlu0 %v870, 126
  %v990 = vpop.permute.xlu0 %989
  %991 = vrot.lane.b32.xlu0 %v871, 126
  %v992 = vpop.permute.xlu0 %991
  %993 = vrot.lane.b32.xlu0 %v899, 126
  %v994 = vpop.permute.xlu0 %993
  %995 = vrot.lane.b32.xlu0 %v872, 126
  %v996 = vpop.permute.xlu0 %995
  %997 = vrot.lane.b32.xlu0 %v873, 126
  %v998 = vpop.permute.xlu0 %997
  %999 = vrot.lane.b32.xlu0 %v900, 126
  %v1000 = vpop.permute.xlu0 %999
  %v1001 = vsel %vm273, %v978, %v980
  %v1002 = vsel %vm273, %v980, %v982
  %v1003 = vsel %vm273, %v984, %v986
  %v1004 = vsel %vm273, %v986, %v988
  %v1005 = vsel %vm273, %v990, %v992
  %v1006 = vsel %vm273, %v992, %v994
  %v1007 = vsel %vm273, %v996, %v998
  %v1008 = vsel %vm273, %v998, %v1000
  %s1017 = scalar_lea.vmem %s2, 64
  %v1018 = vld [vmem:[%s1017] sm:$0xff]
  %v1019 = vld [vmem:[%s1017 + $0x8] sm:$0xff]
  %v1020 = vld [vmem:[%s1017 + $0x10] sm:$0xff]
  %v1021 = vld [vmem:[%s1017 + $0x18] sm:$0xff]
  %v1022 = vld [vmem:[%s1017 + $0x20] sm:$0xff]
  %v1023 = vld [vmem:[%s1017 + $0x28] sm:$0xff]
  %v1024 = vld [vmem:[%s1017 + $0x30] sm:$0xff]
  %v1025 = vld [vmem:[%s1017 + $0x38] sm:$0xff]
  %s1026 = scalar_lea.vmem %s3, 64
  %v1027 = vld [vmem:[%s1026] sm:$0xff]
  %v1028 = vld [vmem:[%s1026 + $0x8] sm:$0xff]
  %v1029 = vld [vmem:[%s1026 + $0x10] sm:$0xff]
  %v1030 = vld [vmem:[%s1026 + $0x18] sm:$0xff]
  %v1031 = vld [vmem:[%s1026 + $0x20] sm:$0xff]
  %v1032 = vld [vmem:[%s1026 + $0x28] sm:$0xff]
  %v1033 = vld [vmem:[%s1026 + $0x30] sm:$0xff]
  %v1034 = vld [vmem:[%s1026 + $0x38] sm:$0xff]
  %1036 = vset.pattern.permute.xlu0 0
  %1037 = vperm.xlu0 %1036, %v1027
  %v1038 = vpop.permute.xlu0 %1037
  %1041 = vset.pattern.permute.xlu0 0
  %1042 = vperm.xlu0 %1041, %v1028
  %v1043 = vpop.permute.xlu0 %1042
  %1046 = vset.pattern.permute.xlu0 0
  %1047 = vperm.xlu0 %1046, %v1029
  %v1048 = vpop.permute.xlu0 %1047
  %1051 = vset.pattern.permute.xlu0 0
  %1052 = vperm.xlu0 %1051, %v1030
  %v1053 = vpop.permute.xlu0 %1052
  %1056 = vset.pattern.permute.xlu0 0
  %1057 = vperm.xlu0 %1056, %v1031
  %v1058 = vpop.permute.xlu0 %1057
  %1061 = vset.pattern.permute.xlu0 0
  %1062 = vperm.xlu0 %1061, %v1032
  %v1063 = vpop.permute.xlu0 %1062
  %1066 = vset.pattern.permute.xlu0 0
  %1067 = vperm.xlu0 %1066, %v1033
  %v1068 = vpop.permute.xlu0 %1067
  %1071 = vset.pattern.permute.xlu0 0
  %1072 = vperm.xlu0 %1071, %v1034
  %v1073 = vpop.permute.xlu0 %1072
  %v1076 = vsel %vm346, %v1018, 0
  %v1079 = vsel %vm346, %v1019, 0
  %v1082 = vsel %vm346, %v1020, 0
  %v1085 = vsel %vm346, %v1021, 0
  %v1088 = vsel %vm346, %v1022, 0
  %v1091 = vsel %vm346, %v1023, 0
  %v1094 = vsel %vm346, %v1024, 0
  %v1097 = vsel %vm346, %v1025, 0
  %1099 = vmatprep.subr.mxu0 %v890
  %1100 = vmatpush1.msra.mxu0 %v889
  %1101 = vmatprep.subr.mxu0 %v892
  %1102 = vmatpush1.msra.mxu0 %v891
  %1103 = vmatprep.subr.mxu0 %v894
  %1104 = vmatpush1.msra.mxu0 %v893
  %1105 = vmatprep.subr.mxu0 %v896
  %1106 = vmatpush1.msra.mxu0 %v895
  %1107 = vmatprep.subr.mxu0 %v1002
  %1108 = vmatpush1.msra.mxu0 %v1001
  %1109 = vmatprep.subr.mxu0 %v1004
  %1110 = vmatpush1.msra.mxu0 %v1003
  %1111 = vmatprep.subr.mxu0 %v1006
  %1112 = vmatpush1.msra.mxu0 %v1005
  %1113 = vmatprep.subr.mxu0 %v1008
  %1114 = vmatpush1.msra.mxu0 %v1007
  %1115 = vmatprep.subr.mxu0 %v970
  %1116 = vmatpush1.msra.mxu0 %v969
  %1117 = vmatprep.subr.mxu0 %v972
  %1118 = vmatpush1.msra.mxu0 %v971
  %1119 = vmatprep.subr.mxu0 %v974
  %1120 = vmatpush1.msra.mxu0 %v973
  %1121 = vmatprep.subr.mxu0 %v976
  %1122 = vmatpush1.msra.mxu0 %v975
  %1123 = vmatprep.subr.mxu0 0.0
  %1124 = vmatpush1.msra.mxu0 0.0
  %1125 = vmatprep.subr.mxu0 0.0
  %1126 = vmatpush1.msra.mxu0 0.0
  %1127 = vmatprep.subr.mxu0 0.0
  %1128 = vmatpush1.msra.mxu0 0.0
  %1129 = vmatprep.subr.mxu0 0.0
  %1130 = vmatpush1.msra.mxu0 0.0
  %1131 = vmatprep.subr.mxu0 0.0
  %1132 = vmatpush1.msra.mxu0 0.0
  %1133 = vmatprep.subr.mxu0 0.0
  %1134 = vmatpush1.msra.mxu0 0.0
  %1135 = vmatprep.subr.mxu0 0.0
  %1136 = vmatpush1.msra.mxu0 0.0
  %1137 = vmatprep.subr.mxu0 0.0
  %1138 = vmatpush1.msra.mxu0 0.0
  %1139 = vmatprep.subr.mxu0 0.0
  %1140 = vmatpush1.msra.mxu0 0.0
  %1141 = vmatprep.subr.mxu0 0.0
  %1142 = vmatpush1.msra.mxu0 0.0
  %1143 = vmatprep.subr.mxu0 0.0
  %1144 = vmatpush1.msra.mxu0 0.0
  %1145 = vmatprep.subr.mxu0 0.0
  %1146 = vmatpush1.msra.mxu0 0.0
  %1147 = vmatprep.subr.mxu0 0.0
  %1148 = vmatpush1.msra.mxu0 0.0
  %1149 = vmatprep.subr.mxu0 0.0
  %1150 = vmatpush1.msra.mxu0 0.0
  %1151 = vmatprep.subr.mxu0 0.0
  %1152 = vmatpush1.msra.mxu0 0.0
  %1153 = vmatprep.subr.mxu0 0.0
  %1154 = vmatpush1.msra.mxu0 0.0
  %1155 = vmatprep.subr.mxu0 0.0
  %1156 = vmatpush1.msra.mxu0 0.0
  %1157 = vmatprep.subr.mxu0 0.0
  %1158 = vmatpush1.msra.mxu0 0.0
  %1159 = vmatprep.subr.mxu0 0.0
  %1160 = vmatpush1.msra.mxu0 0.0
  %1161 = vmatprep.subr.mxu0 0.0
  %1162 = vmatpush1.msra.mxu0 0.0
  %1163 = vmatprep.mubr.f32.mxu0 0.0
  %1164 = vmatmul.mubr.f32.gmra.mrb[0].mxu0 %v1076
  %v1165 = vpop.f32.mrb[0].mxu0
  %v1166 = vadd.f32 %v1038, %v1165
  %v1167 = vpop.f32.mrb[0].mxu0
  %v1168 = vadd.f32 %v1038, %v1167
  %1169 = vmatprep.mubr.f32.mxu0 0.0
  %1170 = vmatmul.mubr.f32.gmra.mrb[0].mxu0 %v1079
  %v1171 = vpop.f32.mrb[0].mxu0
  %v1172 = vadd.f32 %v1043, %v1171
  %v1173 = vpop.f32.mrb[0].mxu0
  %v1174 = vadd.f32 %v1043, %v1173
  %1175 = vmatprep.mubr.f32.mxu0 0.0
  %1176 = vmatmul.mubr.f32.gmra.mrb[0].mxu0 %v1082
  %v1177 = vpop.f32.mrb[0].mxu0
  %v1178 = vadd.f32 %v1048, %v1177
  %v1179 = vpop.f32.mrb[0].mxu0
  %v1180 = vadd.f32 %v1048, %v1179
  %1181 = vmatprep.mubr.f32.mxu0 0.0
  %1182 = vmatmul.mubr.f32.gmra.mrb[0].mxu0 %v1085
  %v1183 = vpop.f32.mrb[0].mxu0
  %v1184 = vadd.f32 %v1053, %v1183
  %v1185 = vpop.f32.mrb[0].mxu0
  %v1186 = vadd.f32 %v1053, %v1185
  %1187 = vmatprep.mubr.f32.mxu0 0.0
  %1188 = vmatmul.mubr.f32.gmra.mrb[0].mxu0 %v1088
  %v1189 = vpop.f32.mrb[0].mxu0
  %v1190 = vadd.f32 %v1058, %v1189
  %v1191 = vpop.f32.mrb[0].mxu0
  %v1192 = vadd.f32 %v1058, %v1191
  %1193 = vmatprep.mubr.f32.mxu0 0.0
  %1194 = vmatmul.mubr.f32.gmra.mrb[0].mxu0 %v1091
  %v1195 = vpop.f32.mrb[0].mxu0
  %v1196 = vadd.f32 %v1063, %v1195
  %v1197 = vpop.f32.mrb[0].mxu0
  %v1198 = vadd.f32 %v1063, %v1197
  %1199 = vmatprep.mubr.f32.mxu0 0.0
  %1200 = vmatmul.mubr.f32.gmra.mrb[0].mxu0 %v1094
  %v1201 = vpop.f32.mrb[0].mxu0
  %v1202 = vadd.f32 %v1068, %v1201
  %v1203 = vpop.f32.mrb[0].mxu0
  %v1204 = vadd.f32 %v1068, %v1203
  %1205 = vmatprep.mubr.f32.mxu0 0.0
  %1206 = vmatmul.mubr.f32.gmra.mrb[0].mxu0 %v1097
  %v1207 = vpop.f32.mrb[0].mxu0
  %v1208 = vadd.f32 %v1073, %v1207
  %v1209 = vpop.f32.mrb[0].mxu0
  %v1210 = vadd.f32 %v1073, %v1209
  %1211 = vdwg.mxu0
  %v1212 = vtanh.pop %v1166
  %v1213 = vtanh.pop %v1168
  %v1214 = vtanh.pop %v1172
  %v1215 = vtanh.pop %v1174
  %v1216 = vtanh.pop %v1178
  %v1217 = vtanh.pop %v1180
  %v1218 = vtanh.pop %v1184
  %v1219 = vtanh.pop %v1186
  %v1220 = vmul.f32 %v1190, 0.5
  %v1221 = vmul.f32 %v1192, 0.5
  %v1222 = vmul.f32 %v1196, 0.5
  %v1223 = vmul.f32 %v1198, 0.5
  %v1224 = vmul.f32 %v1202, 0.5
  %v1225 = vmul.f32 %v1204, 0.5
  %v1226 = vmul.f32 %v1208, 0.5
  %v1227 = vmul.f32 %v1210, 0.5
  %v1228 = vtanh.pop %v1220
  %v1229 = vtanh.pop %v1221
  %v1230 = vtanh.pop %v1222
  %v1231 = vtanh.pop %v1223
  %v1232 = vtanh.pop %v1224
  %v1233 = vtanh.pop %v1225
  %v1234 = vtanh.pop %v1226
  %v1235 = vtanh.pop %v1227
  %v1236 = vmul.f32 %v1228, 0.5
  %v1237 = vmul.f32 %v1229, 0.5
  %v1238 = vmul.f32 %v1230, 0.5
  %v1239 = vmul.f32 %v1231, 0.5
  %v1240 = vmul.f32 %v1232, 0.5
  %v1241 = vmul.f32 %v1233, 0.5
  %v1242 = vmul.f32 %v1234, 0.5
  %v1243 = vmul.f32 %v1235, 0.5
  %v1244 = vadd.f32 %v1236, 0.5
  %v1245 = vadd.f32 %v1237, 0.5
  %v1246 = vadd.f32 %v1238, 0.5
  %v1247 = vadd.f32 %v1239, 0.5
  %v1248 = vadd.f32 %v1240, 0.5
  %v1249 = vadd.f32 %v1241, 0.5
  %v1250 = vadd.f32 %v1242, 0.5
  %v1251 = vadd.f32 %v1243, 0.5
  %v1252 = vmul.f32 %v1212, %v1244
  %v1253 = vmul.f32 %v1213, %v1245
  %v1254 = vmul.f32 %v1214, %v1246
  %v1255 = vmul.f32 %v1215, %v1247
  %v1256 = vmul.f32 %v1216, %v1248
  %v1257 = vmul.f32 %v1217, %v1249
  %v1258 = vmul.f32 %v1218, %v1250
  %v1259 = vmul.f32 %v1219, %v1251
  %s1260 = scalar_lea.vmem %s4, 96
  %v1261 = vld [vmem:[%s1260] sm:$0xff]
  %v1262 = vld [vmem:[%s1260 + $0x8] sm:$0xff]
  %v1263 = vld [vmem:[%s1260 + $0x10] sm:$0xff]
  %v1264 = vld [vmem:[%s1260 + $0x18] sm:$0xff]
  %v1265 = vld [vmem:[%s1260 + $0x20] sm:$0xff]
  %v1266 = vld [vmem:[%s1260 + $0x28] sm:$0xff]
  %v1267 = vld [vmem:[%s1260 + $0x30] sm:$0xff]
  %v1268 = vld [vmem:[%s1260 + $0x38] sm:$0xff]
  %v1269 = vld [vmem:[%s1260 + $0x40] sm:$0xff]
  %v1270 = vld [vmem:[%s1260 + $0x48] sm:$0xff]
  %v1271 = vld [vmem:[%s1260 + $0x50] sm:$0xff]
  %v1272 = vld [vmem:[%s1260 + $0x58] sm:$0xff]
  %s1273 = scalar_lea.vmem %s5, 96
  %v1274 = vld [vmem:[%s1273] sm:$0xff]
  %v1275 = vld [vmem:[%s1273 + $0x8] sm:$0xff]
  %v1276 = vld [vmem:[%s1273 + $0x10] sm:$0xff]
  %v1277 = vld [vmem:[%s1273 + $0x18] sm:$0xff]
  %v1278 = vld [vmem:[%s1273 + $0x20] sm:$0xff]
  %v1279 = vld [vmem:[%s1273 + $0x28] sm:$0xff]
  %v1280 = vld [vmem:[%s1273 + $0x30] sm:$0xff]
  %v1281 = vld [vmem:[%s1273 + $0x38] sm:$0xff]
  %v1282 = vld [vmem:[%s1273 + $0x40] sm:$0xff]
  %v1283 = vld [vmem:[%s1273 + $0x48] sm:$0xff]
  %v1284 = vld [vmem:[%s1273 + $0x50] sm:$0xff]
  %v1285 = vld [vmem:[%s1273 + $0x58] sm:$0xff]
  %1287 = vset.pattern.permute.xlu0 0
  %1288 = vperm.xlu0 %1287, %v1274
  %v1289 = vpop.permute.xlu0 %1288
  %1292 = vset.pattern.permute.xlu0 0
  %1293 = vperm.xlu0 %1292, %v1275
  %v1294 = vpop.permute.xlu0 %1293
  %1297 = vset.pattern.permute.xlu0 0
  %1298 = vperm.xlu0 %1297, %v1276
  %v1299 = vpop.permute.xlu0 %1298
  %1302 = vset.pattern.permute.xlu0 0
  %1303 = vperm.xlu0 %1302, %v1277
  %v1304 = vpop.permute.xlu0 %1303
  %1307 = vset.pattern.permute.xlu0 0
  %1308 = vperm.xlu0 %1307, %v1278
  %v1309 = vpop.permute.xlu0 %1308
  %1312 = vset.pattern.permute.xlu0 0
  %1313 = vperm.xlu0 %1312, %v1279
  %v1314 = vpop.permute.xlu0 %1313
  %1317 = vset.pattern.permute.xlu0 0
  %1318 = vperm.xlu0 %1317, %v1280
  %v1319 = vpop.permute.xlu0 %1318
  %1322 = vset.pattern.permute.xlu0 0
  %1323 = vperm.xlu0 %1322, %v1281
  %v1324 = vpop.permute.xlu0 %1323
  %1327 = vset.pattern.permute.xlu0 0
  %1328 = vperm.xlu0 %1327, %v1282
  %v1329 = vpop.permute.xlu0 %1328
  %1332 = vset.pattern.permute.xlu0 0
  %1333 = vperm.xlu0 %1332, %v1283
  %v1334 = vpop.permute.xlu0 %1333
  %1337 = vset.pattern.permute.xlu0 0
  %1338 = vperm.xlu0 %1337, %v1284
  %v1339 = vpop.permute.xlu0 %1338
  %1342 = vset.pattern.permute.xlu0 0
  %1343 = vperm.xlu0 %1342, %v1285
  %v1344 = vpop.permute.xlu0 %1343
  %v1347 = vsel %vm616, %v1261, 0
  %v1350 = vsel %vm616, %v1262, 0
  %v1353 = vsel %vm616, %v1263, 0
  %v1356 = vsel %vm616, %v1264, 0
  %v1359 = vsel %vm616, %v1265, 0
  %v1362 = vsel %vm616, %v1266, 0
  %v1365 = vsel %vm616, %v1267, 0
  %v1368 = vsel %vm616, %v1268, 0
  %v1371 = vsel %vm616, %v1269, 0
  %v1374 = vsel %vm616, %v1270, 0
  %v1377 = vsel %vm616, %v1271, 0
  %v1380 = vsel %vm616, %v1272, 0
  %1382 = vmatprep.subr.mxu0 %v1253
  %1383 = vmatpush1.msra.mxu0 %v1252
  %1384 = vmatprep.subr.mxu0 %v1255
  %1385 = vmatpush1.msra.mxu0 %v1254
  %1386 = vmatprep.subr.mxu0 %v1257
  %1387 = vmatpush1.msra.mxu0 %v1256
  %1388 = vmatprep.subr.mxu0 %v1259
  %1389 = vmatpush1.msra.mxu0 %v1258
  %1390 = vmatprep.subr.mxu0 0.0
  %1391 = vmatpush1.msra.mxu0 0.0
  %1392 = vmatprep.subr.mxu0 0.0
  %1393 = vmatpush1.msra.mxu0 0.0
  %1394 = vmatprep.subr.mxu0 0.0
  %1395 = vmatpush1.msra.mxu0 0.0
  %1396 = vmatprep.subr.mxu0 0.0
  %1397 = vmatpush1.msra.mxu0 0.0
  %1398 = vmatprep.subr.mxu0 0.0
  %1399 = vmatpush1.msra.mxu0 0.0
  %1400 = vmatprep.subr.mxu0 0.0
  %1401 = vmatpush1.msra.mxu0 0.0
  %1402 = vmatprep.subr.mxu0 0.0
  %1403 = vmatpush1.msra.mxu0 0.0
  %1404 = vmatprep.subr.mxu0 0.0
  %1405 = vmatpush1.msra.mxu0 0.0
  %1406 = vmatprep.subr.mxu0 0.0
  %1407 = vmatpush1.msra.mxu0 0.0
  %1408 = vmatprep.subr.mxu0 0.0
  %1409 = vmatpush1.msra.mxu0 0.0
  %1410 = vmatprep.subr.mxu0 0.0
  %1411 = vmatpush1.msra.mxu0 0.0
  %1412 = vmatprep.subr.mxu0 0.0
  %1413 = vmatpush1.msra.mxu0 0.0
  %1414 = vmatprep.subr.mxu0 0.0
  %1415 = vmatpush1.msra.mxu0 0.0
  %1416 = vmatprep.subr.mxu0 0.0
  %1417 = vmatpush1.msra.mxu0 0.0
  %1418 = vmatprep.subr.mxu0 0.0
  %1419 = vmatpush1.msra.mxu0 0.0
  %1420 = vmatprep.subr.mxu0 0.0
  %1421 = vmatpush1.msra.mxu0 0.0
  %1422 = vmatprep.subr.mxu0 0.0
  %1423 = vmatpush1.msra.mxu0 0.0
  %1424 = vmatprep.subr.mxu0 0.0
  %1425 = vmatpush1.msra.mxu0 0.0
  %1426 = vmatprep.subr.mxu0 0.0
  %1427 = vmatpush1.msra.mxu0 0.0
  %1428 = vmatprep.subr.mxu0 0.0
  %1429 = vmatpush1.msra.mxu0 0.0
  %1430 = vmatprep.subr.mxu0 0.0
  %1431 = vmatpush1.msra.mxu0 0.0
  %1432 = vmatprep.subr.mxu0 0.0
  %1433 = vmatpush1.msra.mxu0 0.0
  %1434 = vmatprep.subr.mxu0 0.0
  %1435 = vmatpush1.msra.mxu0 0.0
  %1436 = vmatprep.subr.mxu0 0.0
  %1437 = vmatpush1.msra.mxu0 0.0
  %1438 = vmatprep.subr.mxu0 0.0
  %1439 = vmatpush1.msra.mxu0 0.0
  %1440 = vmatprep.subr.mxu0 0.0
  %1441 = vmatpush1.msra.mxu0 0.0
  %1442 = vmatprep.subr.mxu0 0.0
  %1443 = vmatpush1.msra.mxu0 0.0
  %1444 = vmatprep.subr.mxu0 0.0
  %1445 = vmatpush1.msra.mxu0 0.0
  %1446 = vmatprep.mubr.f32.mxu0 0.0
  %1447 = vmatmul.mubr.f32.gmra.mrb[0].mxu0 %v1347
  %v1448 = vpop.f32.mrb[0].mxu0
  %v1449 = vadd.f32 %v1289, %v1448
  %v1450 = vpop.f32.mrb[0].mxu0
  %v1451 = vadd.f32 %v1289, %v1450
  %1452 = vmatprep.mubr.f32.mxu0 0.0
  %1453 = vmatmul.mubr.f32.gmra.mrb[0].mxu0 %v1350
  %v1454 = vpop.f32.mrb[0].mxu0
  %v1455 = vadd.f32 %v1294, %v1454
  %v1456 = vpop.f32.mrb[0].mxu0
  %v1457 = vadd.f32 %v1294, %v1456
  %1458 = vmatprep.mubr.f32.mxu0 0.0
  %1459 = vmatmul.mubr.f32.gmra.mrb[0].mxu0 %v1353
  %v1460 = vpop.f32.mrb[0].mxu0
  %v1461 = vadd.f32 %v1299, %v1460
  %v1462 = vpop.f32.mrb[0].mxu0
  %v1463 = vadd.f32 %v1299, %v1462
  %1464 = vmatprep.mubr.f32.mxu0 0.0
  %1465 = vmatmul.mubr.f32.gmra.mrb[0].mxu0 %v1356
  %v1466 = vpop.f32.mrb[0].mxu0
  %v1467 = vadd.f32 %v1304, %v1466
  %v1468 = vpop.f32.mrb[0].mxu0
  %v1469 = vadd.f32 %v1304, %v1468
  %1470 = vmatprep.mubr.f32.mxu0 0.0
  %1471 = vmatmul.mubr.f32.gmra.mrb[0].mxu0 %v1359
  %v1472 = vpop.f32.mrb[0].mxu0
  %v1473 = vadd.f32 %v1309, %v1472
  %v1474 = vpop.f32.mrb[0].mxu0
  %v1475 = vadd.f32 %v1309, %v1474
  %1476 = vmatprep.mubr.f32.mxu0 0.0
  %1477 = vmatmul.mubr.f32.gmra.mrb[0].mxu0 %v1362
  %v1478 = vpop.f32.mrb[0].mxu0
  %v1479 = vadd.f32 %v1314, %v1478
  %v1480 = vpop.f32.mrb[0].mxu0
  %v1481 = vadd.f32 %v1314, %v1480
  %1482 = vmatprep.mubr.f32.mxu0 0.0
  %1483 = vmatmul.mubr.f32.gmra.mrb[0].mxu0 %v1365
  %v1484 = vpop.f32.mrb[0].mxu0
  %v1485 = vadd.f32 %v1319, %v1484
  %v1486 = vpop.f32.mrb[0].mxu0
  %v1487 = vadd.f32 %v1319, %v1486
  %1488 = vmatprep.mubr.f32.mxu0 0.0
  %1489 = vmatmul.mubr.f32.gmra.mrb[0].mxu0 %v1368
  %v1490 = vpop.f32.mrb[0].mxu0
  %v1491 = vadd.f32 %v1324, %v1490
  %v1492 = vpop.f32.mrb[0].mxu0
  %v1493 = vadd.f32 %v1324, %v1492
  %1494 = vmatprep.mubr.f32.mxu0 0.0
  %1495 = vmatmul.mubr.f32.gmra.mrb[0].mxu0 %v1371
  %v1496 = vpop.f32.mrb[0].mxu0
  %v1497 = vadd.f32 %v1329, %v1496
  %v1498 = vpop.f32.mrb[0].mxu0
  %v1499 = vadd.f32 %v1329, %v1498
  %1500 = vmatprep.mubr.f32.mxu0 0.0
  %1501 = vmatmul.mubr.f32.gmra.mrb[0].mxu0 %v1374
  %v1502 = vpop.f32.mrb[0].mxu0
  %v1503 = vadd.f32 %v1334, %v1502
  %v1504 = vpop.f32.mrb[0].mxu0
  %v1505 = vadd.f32 %v1334, %v1504
  %1506 = vmatprep.mubr.f32.mxu0 0.0
  %1507 = vmatmul.mubr.f32.gmra.mrb[0].mxu0 %v1377
  %v1508 = vpop.f32.mrb[0].mxu0
  %v1509 = vadd.f32 %v1339, %v1508
  %v1510 = vpop.f32.mrb[0].mxu0
  %v1511 = vadd.f32 %v1339, %v1510
  %1512 = vmatprep.mubr.f32.mxu0 0.0
  %1513 = vmatmul.mubr.f32.gmra.mrb[0].mxu0 %v1380
  %v1514 = vpop.f32.mrb[0].mxu0
  %v1515 = vadd.f32 %v1344, %v1514
  %v1516 = vpop.f32.mrb[0].mxu0
  %v1517 = vadd.f32 %v1344, %v1516
  %1518 = vdwg.mxu0
  %v1519 = vadd.f32 %v1449, %v790
  %v1520 = vadd.f32 %v1451, %v791
  %v1521 = vadd.f32 %v1455, %v792
  %v1522 = vadd.f32 %v1457, %v793
  %v1523 = vadd.f32 %v1461, %v794
  %v1524 = vadd.f32 %v1463, %v795
  %v1525 = vadd.f32 %v1467, %v796
  %v1526 = vadd.f32 %v1469, %v797
  %s1527 = scalar_lea.vmem %s7, 128
  %1528 = vst [vmem:[%s1527] sm:$0xff] %v1473
  %1529 = vst [vmem:[%s1527 + $0x8] sm:$0xff] %v1475
  %1530 = vst [vmem:[%s1527 + $0x10] sm:$0xff] %v1479
  %1531 = vst [vmem:[%s1527 + $0x18] sm:$0xff] %v1481
  %1532 = vst [vmem:[%s1527 + $0x20] sm:$0xff] %v1485
  %1533 = vst [vmem:[%s1527 + $0x28] sm:$0xff] %v1487
  %1534 = vst [vmem:[%s1527 + $0x30] sm:$0xff] %v1491
  %1535 = vst [vmem:[%s1527 + $0x38] sm:$0xff] %v1493
  %1536 = vst [vmem:[%s1527 + $0x40] sm:$0xff] %v1497
  %1537 = vst [vmem:[%s1527 + $0x48] sm:$0xff] %v1499
  %1538 = vst [vmem:[%s1527 + $0x50] sm:$0xff] %v1503
  %1539 = vst [vmem:[%s1527 + $0x58] sm:$0xff] %v1505
  %1540 = vst [vmem:[%s1527 + $0x60] sm:$0xff] %v1509
  %1541 = vst [vmem:[%s1527 + $0x68] sm:$0xff] %v1511
  %1542 = vst [vmem:[%s1527 + $0x70] sm:$0xff] %v1515
  %1543 = vst [vmem:[%s1527 + $0x78] sm:$0xff] %v1517
  %1544 = vst [vmem:[%s6] sm:$0xff] %v1519
  %1545 = vst [vmem:[%s6 + $0x8] sm:$0xff] %v1520
  %1546 = vst [vmem:[%s6 + $0x10] sm:$0xff] %v1521
  %1547 = vst [vmem:[%s6 + $0x18] sm:$0xff] %v1522
  %1548 = vst [vmem:[%s6 + $0x20] sm:$0xff] %v1523
  %1549 = vst [vmem:[%s6 + $0x28] sm:$0xff] %v1524
  %1550 = vst [vmem:[%s6 + $0x30] sm:$0xff] %v1525
  %1551 = vst [vmem:[%s6 + $0x38] sm:$0xff] %v1526
  // Predicated region
  $region26: #{wavenet_block_pallas.1} parent=0 // pred_check
    _
  $region27: #{wavenet_block_pallas.1} parent=0 // pred_check_branch
    %1553 = sbr.rel (0) target = $region29
  $region28: #{wavenet_block_pallas.1} parent=0 // pred_region
    _
  $region29: #{wavenet_block_pallas.1} parent=0 // pred_fallthru
    _
  // Predicated region
  $region30: #{wavenet_block_pallas.1} parent=0 // pred_check
    _
  $region31: #{wavenet_block_pallas.1} parent=0 // pred_check_branch
    %1555 = sbr.rel (0) target = $region33
  $region32: #{wavenet_block_pallas.1} parent=0 // pred_region
    _
  $region33: #{wavenet_block_pallas.1} parent=0 // pred_fallthru
    _
  // Predicated region
  $region34: #{wavenet_block_pallas.1} parent=0 // pred_check
    _
  $region35: #{wavenet_block_pallas.1} parent=0 // pred_check_branch
    %1557 = sbr.rel (0) target = $region37
  $region36: #{wavenet_block_pallas.1} parent=0 // pred_region
    _
  $region37: #{wavenet_block_pallas.1} parent=0 // pred_fallthru
    _
  // Predicated region
  $region38: #{wavenet_block_pallas.1} parent=0 // pred_check
    _
  $region39: #{wavenet_block_pallas.1} parent=0 // pred_check_branch
    %1559 = sbr.rel (0) target = $region41
  $region40: #{wavenet_block_pallas.1} parent=0 // pred_region
    _
  $region41: #{wavenet_block_pallas.1} parent=0 // pred_fallthru
    _

</llo_original>
